<compile_context>
chip_gen: v7x
topology: tpu7x:2x2x1
jax: 0.10.0
libtpu: 0.0.40
codegen_flags: <defaults>
</compile_context>

<pallas_src>
import jax
import jax.numpy as jnp
from jax.experimental import pallas as pl
from jax.experimental.pallas import tpu as pltpu

# ----------------------------- config ---------------------------------------
B        = 2          # batch
T        = 8          # caption length (power of 2)
E        = 32         # embed_size (plays the role of 300)
DC       = 64         # image_vectors (plays the role of 2048)
HF = WF  = 4          # vision feature-map spatial dims
N_SP     = HF * WF    # flattened spatial positions (power of 2)
HID      = 128        # prediction hidden layer (plays the role of 1024)
VOCAB    = 128        # vocab_size
N_LAYERS = 6          # LanguageModule layers
K        = 3          # causal conv kernel size
BT       = B * T      # batch folded into the matmul M dimension

assert (T & (T - 1)) == 0 and (N_SP & (N_SP - 1)) == 0
T_LOG2   = T.bit_length() - 1
NSP_LOG2 = N_SP.bit_length() - 1


# ------------------------- fused forward kernel -----------------------------
def _fused_kernel(cap_ref, emb_ref, wlang_ref, blang_ref, u_ref,
                  vcat_ref, vtcat_ref, wa_ref, wc_ref, bac_ref, wl_ref,
                  o_ref):
    f32, bf16 = jnp.float32, jnp.bfloat16

    # ---- embedding: one-hot gather on the MXU ------------------------------
    cap = cap_ref[...]                                             # (BT, 1) i32
    vocab_iota = jax.lax.broadcasted_iota(jnp.int32, (BT, VOCAB), 1)
    onehot = (vocab_iota == cap).astype(bf16)                      # (BT, VOCAB)
    x = jnp.dot(onehot, emb_ref[...], preferred_element_type=f32)  # (BT, E) f32

    # ---- causal-shift masks (hoisted): within-batch time index via 2-D iota -
    t_loc = jax.lax.broadcasted_iota(jnp.int32, (BT, E), 0) & (T - 1)
    mask1 = t_loc >= 1           # zero rows that would wrap / leak across seam
    mask2 = t_loc >= 2

    # ---- LanguageModule: 6 gated causal-conv layers --------------------------
    # shifts via XLU roll + mask; three accumulating per-tap dots per layer.
    for l in range(N_LAYERS):
        x1 = jnp.where(mask1, pltpu.roll(x, shift=1, axis=0), 0.0)  # x[t-1]
        x2 = jnp.where(mask2, pltpu.roll(x, shift=2, axis=0), 0.0)  # x[t-2]
        g = (jnp.dot(x2.astype(bf16), wlang_ref[l * K + 0],
                     preferred_element_type=f32)
             + jnp.dot(x1.astype(bf16), wlang_ref[l * K + 1],
                       preferred_element_type=f32)
             + jnp.dot(x.astype(bf16), wlang_ref[l * K + 2],
                       preferred_element_type=f32)
             + blang_ref[l])                                        # (BT, 2E)
        x = g[:, :E] * jax.nn.sigmoid(g[:, E:])                     # h_a*sig(h_b)

    c = x                                                           # (BT, E) f32
    c_bf = c.astype(bf16)

    # ---- AttentionModule: single masked attention over all B*N columns ------
    aux = jnp.dot(c_bf, u_ref[...], preferred_element_type=f32)     # (BT, DC)
    row_b = jax.lax.broadcasted_iota(jnp.int32, (BT, B * N_SP), 0) >> T_LOG2
    col_b = jax.lax.broadcasted_iota(jnp.int32, (BT, B * N_SP), 1) >> NSP_LOG2
    blk_bias = jnp.where(row_b == col_b, 0.0, -1e9).astype(f32)     # (BT, B*N)
    s = (jnp.dot(aux.astype(bf16), vcat_ref[...],
                 preferred_element_type=f32) + blk_bias)            # (BT, B*N)
    s = s - jnp.max(s, axis=-1, keepdims=True)
    e = jnp.exp(s)                                 # cross-batch cols -> exactly 0
    w = e * pl.reciprocal(jnp.sum(e, axis=-1, keepdims=True), approx=True)
    a = jnp.dot(w.astype(bf16), vtcat_ref[...],
                preferred_element_type=f32)                         # (BT, DC)

    # ---- PredictionModule: 1x1 convs + LeakyReLU(0.1) + linear + logsoftmax -
    h = (jnp.dot(a.astype(bf16), wa_ref[...], preferred_element_type=f32)
         + jnp.dot(c_bf, wc_ref[...], preferred_element_type=f32)
         + bac_ref[...])                           # biases pre-summed on host
    h = jnp.maximum(h, 0.1 * h)                    # LeakyReLU(0.1)
    p = jnp.dot(h.astype(bf16), wl_ref[...], preferred_element_type=f32)
    m = jnp.max(p, axis=-1, keepdims=True)
    lse = m + jnp.log(jnp.sum(jnp.exp(p - m), axis=-1, keepdims=True))
    o_ref[...] = p - lse                           # (BT, VOCAB), lane-dense 128


def _full(shape):
    return pl.BlockSpec(shape, lambda i: (0,) * len(shape))


def cnn_cnn_ce_fused(cap, emb, wlang, blang, U, vcat, vtcat, wa, wc, bac, wl):
    out = pl.pallas_call(
        _fused_kernel,
        out_shape=jax.ShapeDtypeStruct((BT, VOCAB), jnp.float32),
        grid=(1,),
        in_specs=[
            _full((BT, 1)),                       # caption ids (i32)
            _full((VOCAB, E)),                    # embedding table (bf16)
            _full((N_LAYERS * K, E, 2 * E)),      # per-(layer,tap) conv weights
            _full((N_LAYERS, 1, 2 * E)),          # packed conv biases (f32)
            _full((E, DC)),                       # attention U (bf16)
            _full((DC, B * N_SP)),                # v concatenated over batch
            _full((B * N_SP, DC)),                # v^T concatenated over batch
            _full((DC, HID)),                     # conv_a 1x1 weight (bf16)
            _full((E, HID)),                      # conv_c 1x1 weight (bf16)
            _full((1, HID)),                      # conv_a + conv_c bias (f32)
            _full((HID, VOCAB)),                  # linear weight (bf16)
        ],
        out_specs=_full((BT, VOCAB)),
        compiler_params=pltpu.CompilerParams(
            dimension_semantics=("arbitrary",)),
    )(cap, emb, wlang, blang, U, vcat, vtcat, wa, wc, bac, wl)
    return out.reshape(B, T, VOCAB)


# ------------------------------ parameters ----------------------------------
def init_params(key):
    ks = jax.random.split(key, 9)

    def nrm(k, shape, scale=0.05):
        return scale * jax.random.normal(k, shape, dtype=jnp.float32)

    emb = nrm(ks[0], (VOCAB, E), 1.0)
    emb = emb.at[VOCAB - 1].set(0.0)          # nn.Embedding padding_idx=-1 row

    # torch CausalConv1d weight: (E_out, E_in, K), bias (E,), per layer x {a,b}
    w_lang = nrm(ks[1], (N_LAYERS, 2, E, E, K))
    b_lang = nrm(ks[2], (N_LAYERS, 2, E))
    U       = nrm(ks[3], (E, DC))             # AttentionModule.U (De, Dc)
    w_conva = nrm(ks[4], (HID, DC))           # Conv1d(DC, HID, 1) weight
    b_conva = nrm(ks[5], (HID,))
    w_convc = nrm(ks[6], (HID, E))            # Conv1d(E, HID, 1) weight
    b_convc = nrm(ks[7], (HID,))
    w_lin   = nrm(ks[8], (VOCAB, HID))        # Linear(HID, VOCAB, bias=False)

    raw = dict(emb=emb, w_lang=w_lang, b_lang=b_lang, U=U,
               w_conva=w_conva, b_conva=b_conva,
               w_convc=w_convc, b_convc=b_convc, w_lin=w_lin)

    # pack per (layer, tap): W[l*K+j][e_in, gate*E + e_out] = w_lang[l,gate,e_out,e_in,j]
    # tap j pairs with causal shift s = K-1-j; gate 0 -> conv_a, gate 1 -> conv_b
    w_pack = jnp.transpose(w_lang, (0, 4, 3, 1, 2)).reshape(N_LAYERS * K, E, 2 * E)
    b_pack = b_lang.reshape(N_LAYERS, 1, 2 * E)

    bf = jnp.bfloat16
    kern = dict(
        embedding=emb.astype(bf),
        w_lang=w_pack.astype(bf), b_lang=b_pack,
        U=U.astype(bf),
        wa=w_conva.T.astype(bf),
        wc=w_convc.T.astype(bf),
        bac=(b_conva + b_convc).reshape(1, HID),   # pre-summed prediction bias
        wl=w_lin.T.astype(bf),
    )
    return raw, kern


# ------------------------------ forward -------------------------------------
def cnn_cnn_ce_forward(kern, v_feat, caption):
    # TODO(synk): VisionModule is a pretrained torchvision ResNet50 backbone
    # with no checkpoint available; its (B, Dc, H', W') feature map `v_feat`
    # is taken as an input.
    v = v_feat.reshape(B, DC, N_SP)                           # torch v.view(...)
    vcat  = jnp.transpose(v, (1, 0, 2)).reshape(DC, B * N_SP).astype(jnp.bfloat16)
    vtcat = jnp.transpose(v, (0, 2, 1)).reshape(B * N_SP, DC).astype(jnp.bfloat16)
    cap = caption.reshape(BT, 1).astype(jnp.int32)
    return cnn_cnn_ce_fused(cap, kern["embedding"], kern["w_lang"],
                            kern["b_lang"], kern["U"], vcat, vtcat,
                            kern["wa"], kern["wc"], kern["bac"], kern["wl"])


# --------------------- pure-JAX f32 reference (torch port) -------------------
def reference_forward(raw, v_feat, caption):
    x = raw["emb"][caption]                       # (B, T, E)
    x = jnp.swapaxes(x, 1, 2)                     # (B, E, T)
    for l in range(N_LAYERS):
        xp = jnp.pad(x, ((0, 0), (0, 0), (K - 1, 0)))
        gates = []
        for g in range(2):
            acc = raw["b_lang"][l, g][None, :, None]
            for j in range(K):
                acc = acc + jnp.einsum('oi,bit->bot',
                                       raw["w_lang"][l, g, :, :, j],
                                       xp[:, :, j:j + T])
            gates.append(acc)
        x = gates[0] * jax.nn.sigmoid(gates[1])
    c = x                                         # (B, E, T)
    v = v_feat.reshape(B, DC, N_SP)
    aux = jnp.einsum('bet,ed->btd', c, raw["U"])
    S = jnp.einsum('btd,bdn->btn', aux, v)
    w = jax.nn.softmax(S, axis=2)
    a = jnp.einsum('btn,bdn->btd', w, v)          # torch: w @ v.transpose(1,2)
    h = (jnp.einsum('hd,btd->bth', raw["w_conva"], a) + raw["b_conva"][None, None, :]
         + jnp.einsum('he,bet->bth', raw["w_convc"], c) + raw["b_convc"][None, None, :])
    h = jnp.where(h >= 0, h, 0.1 * h)
    P = jnp.einsum('vh,bth->btv', raw["w_lin"], h)
    return jax.nn.log_softmax(P, axis=-1)


# ------------------------------- main ---------------------------------------
if __name__ == "__main__":
    key = jax.random.PRNGKey(0)
    kp, kc, kv = jax.random.split(key, 3)
    raw, kern = init_params(kp)
    caption = jax.random.randint(kc, (B, T), 0, VOCAB, dtype=jnp.int32)
    v_feat = jax.random.normal(kv, (B, DC, HF, WF), dtype=jnp.float32)

    out = jax.jit(cnn_cnn_ce_forward)(kern, v_feat, caption)
    out = jax.block_until_ready(out)
    assert out.shape == (B, T, VOCAB) and out.dtype == jnp.float32
    # sanity: log_softmax rows sum to ~1 in prob space
    assert bool(jnp.allclose(jnp.exp(out).sum(-1), 1.0, atol=1e-4))
    # pure-JAX f32 reference check (loose tol: bf16 MXU inputs + approx recip)
    ref = reference_forward(raw, v_feat, caption)
    max_err = float(jnp.max(jnp.abs(out - ref)))
    assert max_err < 0.1, f"max abs err vs reference: {max_err}"
    print("KERNEL_OK")
</pallas_src>

<mosaic_0001>
module attributes {stable_mosaic.version = 11 : i64} {
  func.func @_fused_kernel(%arg0: i32, %arg1: memref<16x1xi32, #tpu.memory_space<vmem>>, %arg2: memref<128x32xbf16, #tpu.memory_space<vmem>>, %arg3: memref<18x32x64xbf16, #tpu.memory_space<vmem>>, %arg4: memref<6x1x64xf32, #tpu.memory_space<vmem>>, %arg5: memref<32x64xbf16, #tpu.memory_space<vmem>>, %arg6: memref<64x32xbf16, #tpu.memory_space<vmem>>, %arg7: memref<32x64xbf16, #tpu.memory_space<vmem>>, %arg8: memref<64x128xbf16, #tpu.memory_space<vmem>>, %arg9: memref<32x128xbf16, #tpu.memory_space<vmem>>, %arg10: memref<1x128xf32, #tpu.memory_space<vmem>>, %arg11: memref<128x128xbf16, #tpu.memory_space<vmem>>, %arg12: memref<16x128xf32, #tpu.memory_space<vmem>>) attributes {dimension_semantics = [#tpu.dimension_semantics<arbitrary>], iteration_bounds = array<i64: 1>, scalar_prefetch = 0 : i64, scratch_operands = 0 : i64, tpu.core_type = #tpu.core_type<tc>, window_params = [{pipeline_mode = #tpu.pipeline_mode<synchronous>, transform_indices = @transform_0, window_bounds = array<i64: 16, 1>}, {pipeline_mode = #tpu.pipeline_mode<synchronous>, transform_indices = @transform_1, window_bounds = array<i64: 128, 32>}, {pipeline_mode = #tpu.pipeline_mode<synchronous>, transform_indices = @transform_2, window_bounds = array<i64: 18, 32, 64>}, {pipeline_mode = #tpu.pipeline_mode<synchronous>, transform_indices = @transform_3, window_bounds = array<i64: 6, 1, 64>}, {pipeline_mode = #tpu.pipeline_mode<synchronous>, transform_indices = @transform_4, window_bounds = array<i64: 32, 64>}, {pipeline_mode = #tpu.pipeline_mode<synchronous>, transform_indices = @transform_5, window_bounds = array<i64: 64, 32>}, {pipeline_mode = #tpu.pipeline_mode<synchronous>, transform_indices = @transform_6, window_bounds = array<i64: 32, 64>}, {pipeline_mode = #tpu.pipeline_mode<synchronous>, transform_indices = @transform_7, window_bounds = array<i64: 64, 128>}, {pipeline_mode = #tpu.pipeline_mode<synchronous>, transform_indices = @transform_8, window_bounds = array<i64: 32, 128>}, {pipeline_mode = #tpu.pipeline_mode<synchronous>, transform_indices = @transform_9, window_bounds = array<i64: 1, 128>}, {pipeline_mode = #tpu.pipeline_mode<synchronous>, transform_indices = @transform_10, window_bounds = array<i64: 128, 128>}, {pipeline_mode = #tpu.pipeline_mode<synchronous>, transform_indices = @transform_11, window_bounds = array<i64: 16, 128>}]} {
    %c0 = arith.constant 0 : index
    %c0_0 = arith.constant 0 : index
    %0 = vector.load %arg1[%c0, %c0_0] : memref<16x1xi32, #tpu.memory_space<vmem>>, vector<16x1xi32>
    %1 = tpu.iota {dimensions = array<i32: 1>} : vector<16x128xi32>
    %2 = vector.broadcast %0 : vector<16x1xi32> to vector<16x128xi32>
    %3 = arith.cmpi eq, %1, %2 : vector<16x128xi32>
    %4 = arith.extui %3 : vector<16x128xi1> to vector<16x128xi32>
    %5 = arith.sitofp %4 : vector<16x128xi32> to vector<16x128xf32>
    %6 = arith.truncf %5 : vector<16x128xf32> to vector<16x128xbf16>
    %c0_1 = arith.constant 0 : index
    %c0_2 = arith.constant 0 : index
    %7 = vector.load %arg2[%c0_1, %c0_2] : memref<128x32xbf16, #tpu.memory_space<vmem>>, vector<128x32xbf16>
    %cst = arith.constant dense<0.000000e+00> : vector<16x32xf32>
    %8 = tpu.matmul %6, %7, %cst {dimension_numbers = #tpu.dot_dimension_numbers<[1], [0], [0], [1], [0, 0, 1, 1], [], []>} : vector<16x128xbf16>, vector<128x32xbf16>, vector<16x32xf32> -> vector<16x32xf32>
    %9 = tpu.iota {dimensions = array<i32: 0>} : vector<16x32xi32>
    %c7_i32 = arith.constant 7 : i32
    %10 = vector.broadcast %c7_i32 : i32 to vector<16x32xi32>
    %11 = arith.andi %9, %10 : vector<16x32xi32>
    %c1_i32 = arith.constant 1 : i32
    %12 = vector.broadcast %c1_i32 : i32 to vector<16x32xi32>
    %13 = arith.cmpi sge, %11, %12 : vector<16x32xi32>
    %c2_i32 = arith.constant 2 : i32
    %14 = vector.broadcast %c2_i32 : i32 to vector<16x32xi32>
    %15 = arith.cmpi sge, %11, %14 : vector<16x32xi32>
    %c1_i32_3 = arith.constant 1 : i32
    %16 = tpu.dynamic_rotate %8 by %c1_i32_3 dim 0 : vector<16x32xf32>, i32 -> vector<16x32xf32>
    %cst_4 = arith.constant 0.000000e+00 : f32
    %17 = vector.broadcast %cst_4 : f32 to vector<16x32xf32>
    %18 = arith.select %13, %16, %17 : vector<16x32xi1>, vector<16x32xf32>
    %c2_i32_5 = arith.constant 2 : i32
    %19 = tpu.dynamic_rotate %8 by %c2_i32_5 dim 0 : vector<16x32xf32>, i32 -> vector<16x32xf32>
    %cst_6 = arith.constant 0.000000e+00 : f32
    %20 = vector.broadcast %cst_6 : f32 to vector<16x32xf32>
    %21 = arith.select %15, %19, %20 : vector<16x32xi1>, vector<16x32xf32>
    %22 = arith.truncf %21 : vector<16x32xf32> to vector<16x32xbf16>
    %c0_7 = arith.constant 0 : index
    %c0_8 = arith.constant 0 : index
    %c0_9 = arith.constant 0 : index
    %23 = vector.load %arg3[%c0_7, %c0_8, %c0_9] : memref<18x32x64xbf16, #tpu.memory_space<vmem>>, vector<1x32x64xbf16>
    %24 = vector.shape_cast %23 : vector<1x32x64xbf16> to vector<32x64xbf16>
    %cst_10 = arith.constant dense<0.000000e+00> : vector<16x64xf32>
    %25 = tpu.matmul %22, %24, %cst_10 {dimension_numbers = #tpu.dot_dimension_numbers<[1], [0], [0], [1], [0, 0, 1, 1], [], []>} : vector<16x32xbf16>, vector<32x64xbf16>, vector<16x64xf32> -> vector<16x64xf32>
    %26 = arith.truncf %18 : vector<16x32xf32> to vector<16x32xbf16>
    %c1 = arith.constant 1 : index
    %c0_11 = arith.constant 0 : index
    %c0_12 = arith.constant 0 : index
    %27 = vector.load %arg3[%c1, %c0_11, %c0_12] : memref<18x32x64xbf16, #tpu.memory_space<vmem>>, vector<1x32x64xbf16>
    %28 = vector.shape_cast %27 : vector<1x32x64xbf16> to vector<32x64xbf16>
    %cst_13 = arith.constant dense<0.000000e+00> : vector<16x64xf32>
    %29 = tpu.matmul %26, %28, %cst_13 {dimension_numbers = #tpu.dot_dimension_numbers<[1], [0], [0], [1], [0, 0, 1, 1], [], []>} : vector<16x32xbf16>, vector<32x64xbf16>, vector<16x64xf32> -> vector<16x64xf32>
    %30 = arith.addf %25, %29 : vector<16x64xf32>
    %31 = arith.truncf %8 : vector<16x32xf32> to vector<16x32xbf16>
    %c2 = arith.constant 2 : index
    %c0_14 = arith.constant 0 : index
    %c0_15 = arith.constant 0 : index
    %32 = vector.load %arg3[%c2, %c0_14, %c0_15] : memref<18x32x64xbf16, #tpu.memory_space<vmem>>, vector<1x32x64xbf16>
    %33 = vector.shape_cast %32 : vector<1x32x64xbf16> to vector<32x64xbf16>
    %cst_16 = arith.constant dense<0.000000e+00> : vector<16x64xf32>
    %34 = tpu.matmul %31, %33, %cst_16 {dimension_numbers = #tpu.dot_dimension_numbers<[1], [0], [0], [1], [0, 0, 1, 1], [], []>} : vector<16x32xbf16>, vector<32x64xbf16>, vector<16x64xf32> -> vector<16x64xf32>
    %35 = arith.addf %30, %34 : vector<16x64xf32>
    %c0_17 = arith.constant 0 : index
    %c0_18 = arith.constant 0 : index
    %c0_19 = arith.constant 0 : index
    %36 = vector.load %arg4[%c0_17, %c0_18, %c0_19] : memref<6x1x64xf32, #tpu.memory_space<vmem>>, vector<1x1x64xf32>
    %37 = vector.shape_cast %36 : vector<1x1x64xf32> to vector<1x64xf32>
    %38 = vector.broadcast %37 : vector<1x64xf32> to vector<16x64xf32>
    %39 = arith.addf %35, %38 : vector<16x64xf32>
    %40 = vector.extract_strided_slice %39 {offsets = [0, 0], sizes = [16, 32], strides = [1, 1]} : vector<16x64xf32> to vector<16x32xf32>
    %41 = vector.extract_strided_slice %39 {offsets = [0, 32], sizes = [16, 32], strides = [1, 1]} : vector<16x64xf32> to vector<16x32xf32>
    %42 = arith.negf %41 : vector<16x32xf32>
    %43 = math.exp %42 : vector<16x32xf32>
    %cst_20 = arith.constant 1.000000e+00 : f32
    %44 = vector.broadcast %cst_20 : f32 to vector<16x32xf32>
    %45 = arith.addf %44, %43 : vector<16x32xf32>
    %46 = arith.divf %44, %45 : vector<16x32xf32>
    %47 = arith.mulf %40, %46 : vector<16x32xf32>
    %c1_i32_21 = arith.constant 1 : i32
    %48 = tpu.dynamic_rotate %47 by %c1_i32_21 dim 0 : vector<16x32xf32>, i32 -> vector<16x32xf32>
    %cst_22 = arith.constant 0.000000e+00 : f32
    %49 = vector.broadcast %cst_22 : f32 to vector<16x32xf32>
    %50 = arith.select %13, %48, %49 : vector<16x32xi1>, vector<16x32xf32>
    %c2_i32_23 = arith.constant 2 : i32
    %51 = tpu.dynamic_rotate %47 by %c2_i32_23 dim 0 : vector<16x32xf32>, i32 -> vector<16x32xf32>
    %cst_24 = arith.constant 0.000000e+00 : f32
    %52 = vector.broadcast %cst_24 : f32 to vector<16x32xf32>
    %53 = arith.select %15, %51, %52 : vector<16x32xi1>, vector<16x32xf32>
    %54 = arith.truncf %53 : vector<16x32xf32> to vector<16x32xbf16>
    %c3 = arith.constant 3 : index
    %c0_25 = arith.constant 0 : index
    %c0_26 = arith.constant 0 : index
    %55 = vector.load %arg3[%c3, %c0_25, %c0_26] : memref<18x32x64xbf16, #tpu.memory_space<vmem>>, vector<1x32x64xbf16>
    %56 = vector.shape_cast %55 : vector<1x32x64xbf16> to vector<32x64xbf16>
    %cst_27 = arith.constant dense<0.000000e+00> : vector<16x64xf32>
    %57 = tpu.matmul %54, %56, %cst_27 {dimension_numbers = #tpu.dot_dimension_numbers<[1], [0], [0], [1], [0, 0, 1, 1], [], []>} : vector<16x32xbf16>, vector<32x64xbf16>, vector<16x64xf32> -> vector<16x64xf32>
    %58 = arith.truncf %50 : vector<16x32xf32> to vector<16x32xbf16>
    %c4 = arith.constant 4 : index
    %c0_28 = arith.constant 0 : index
    %c0_29 = arith.constant 0 : index
    %59 = vector.load %arg3[%c4, %c0_28, %c0_29] : memref<18x32x64xbf16, #tpu.memory_space<vmem>>, vector<1x32x64xbf16>
    %60 = vector.shape_cast %59 : vector<1x32x64xbf16> to vector<32x64xbf16>
    %cst_30 = arith.constant dense<0.000000e+00> : vector<16x64xf32>
    %61 = tpu.matmul %58, %60, %cst_30 {dimension_numbers = #tpu.dot_dimension_numbers<[1], [0], [0], [1], [0, 0, 1, 1], [], []>} : vector<16x32xbf16>, vector<32x64xbf16>, vector<16x64xf32> -> vector<16x64xf32>
    %62 = arith.addf %57, %61 : vector<16x64xf32>
    %63 = arith.truncf %47 : vector<16x32xf32> to vector<16x32xbf16>
    %c5 = arith.constant 5 : index
    %c0_31 = arith.constant 0 : index
    %c0_32 = arith.constant 0 : index
    %64 = vector.load %arg3[%c5, %c0_31, %c0_32] : memref<18x32x64xbf16, #tpu.memory_space<vmem>>, vector<1x32x64xbf16>
    %65 = vector.shape_cast %64 : vector<1x32x64xbf16> to vector<32x64xbf16>
    %cst_33 = arith.constant dense<0.000000e+00> : vector<16x64xf32>
    %66 = tpu.matmul %63, %65, %cst_33 {dimension_numbers = #tpu.dot_dimension_numbers<[1], [0], [0], [1], [0, 0, 1, 1], [], []>} : vector<16x32xbf16>, vector<32x64xbf16>, vector<16x64xf32> -> vector<16x64xf32>
    %67 = arith.addf %62, %66 : vector<16x64xf32>
    %c1_34 = arith.constant 1 : index
    %c0_35 = arith.constant 0 : index
    %c0_36 = arith.constant 0 : index
    %68 = vector.load %arg4[%c1_34, %c0_35, %c0_36] : memref<6x1x64xf32, #tpu.memory_space<vmem>>, vector<1x1x64xf32>
    %69 = vector.shape_cast %68 : vector<1x1x64xf32> to vector<1x64xf32>
    %70 = vector.broadcast %69 : vector<1x64xf32> to vector<16x64xf32>
    %71 = arith.addf %67, %70 : vector<16x64xf32>
    %72 = vector.extract_strided_slice %71 {offsets = [0, 0], sizes = [16, 32], strides = [1, 1]} : vector<16x64xf32> to vector<16x32xf32>
    %73 = vector.extract_strided_slice %71 {offsets = [0, 32], sizes = [16, 32], strides = [1, 1]} : vector<16x64xf32> to vector<16x32xf32>
    %74 = arith.negf %73 : vector<16x32xf32>
    %75 = math.exp %74 : vector<16x32xf32>
    %cst_37 = arith.constant 1.000000e+00 : f32
    %76 = vector.broadcast %cst_37 : f32 to vector<16x32xf32>
    %77 = arith.addf %76, %75 : vector<16x32xf32>
    %78 = arith.divf %76, %77 : vector<16x32xf32>
    %79 = arith.mulf %72, %78 : vector<16x32xf32>
    %c1_i32_38 = arith.constant 1 : i32
    %80 = tpu.dynamic_rotate %79 by %c1_i32_38 dim 0 : vector<16x32xf32>, i32 -> vector<16x32xf32>
    %cst_39 = arith.constant 0.000000e+00 : f32
    %81 = vector.broadcast %cst_39 : f32 to vector<16x32xf32>
    %82 = arith.select %13, %80, %81 : vector<16x32xi1>, vector<16x32xf32>
    %c2_i32_40 = arith.constant 2 : i32
    %83 = tpu.dynamic_rotate %79 by %c2_i32_40 dim 0 : vector<16x32xf32>, i32 -> vector<16x32xf32>
    %cst_41 = arith.constant 0.000000e+00 : f32
    %84 = vector.broadcast %cst_41 : f32 to vector<16x32xf32>
    %85 = arith.select %15, %83, %84 : vector<16x32xi1>, vector<16x32xf32>
    %86 = arith.truncf %85 : vector<16x32xf32> to vector<16x32xbf16>
    %c6 = arith.constant 6 : index
    %c0_42 = arith.constant 0 : index
    %c0_43 = arith.constant 0 : index
    %87 = vector.load %arg3[%c6, %c0_42, %c0_43] : memref<18x32x64xbf16, #tpu.memory_space<vmem>>, vector<1x32x64xbf16>
    %88 = vector.shape_cast %87 : vector<1x32x64xbf16> to vector<32x64xbf16>
    %cst_44 = arith.constant dense<0.000000e+00> : vector<16x64xf32>
    %89 = tpu.matmul %86, %88, %cst_44 {dimension_numbers = #tpu.dot_dimension_numbers<[1], [0], [0], [1], [0, 0, 1, 1], [], []>} : vector<16x32xbf16>, vector<32x64xbf16>, vector<16x64xf32> -> vector<16x64xf32>
    %90 = arith.truncf %82 : vector<16x32xf32> to vector<16x32xbf16>
    %c7 = arith.constant 7 : index
    %c0_45 = arith.constant 0 : index
    %c0_46 = arith.constant 0 : index
    %91 = vector.load %arg3[%c7, %c0_45, %c0_46] : memref<18x32x64xbf16, #tpu.memory_space<vmem>>, vector<1x32x64xbf16>
    %92 = vector.shape_cast %91 : vector<1x32x64xbf16> to vector<32x64xbf16>
    %cst_47 = arith.constant dense<0.000000e+00> : vector<16x64xf32>
    %93 = tpu.matmul %90, %92, %cst_47 {dimension_numbers = #tpu.dot_dimension_numbers<[1], [0], [0], [1], [0, 0, 1, 1], [], []>} : vector<16x32xbf16>, vector<32x64xbf16>, vector<16x64xf32> -> vector<16x64xf32>
    %94 = arith.addf %89, %93 : vector<16x64xf32>
    %95 = arith.truncf %79 : vector<16x32xf32> to vector<16x32xbf16>
    %c8 = arith.constant 8 : index
    %c0_48 = arith.constant 0 : index
    %c0_49 = arith.constant 0 : index
    %96 = vector.load %arg3[%c8, %c0_48, %c0_49] : memref<18x32x64xbf16, #tpu.memory_space<vmem>>, vector<1x32x64xbf16>
    %97 = vector.shape_cast %96 : vector<1x32x64xbf16> to vector<32x64xbf16>
    %cst_50 = arith.constant dense<0.000000e+00> : vector<16x64xf32>
    %98 = tpu.matmul %95, %97, %cst_50 {dimension_numbers = #tpu.dot_dimension_numbers<[1], [0], [0], [1], [0, 0, 1, 1], [], []>} : vector<16x32xbf16>, vector<32x64xbf16>, vector<16x64xf32> -> vector<16x64xf32>
    %99 = arith.addf %94, %98 : vector<16x64xf32>
    %c2_51 = arith.constant 2 : index
    %c0_52 = arith.constant 0 : index
    %c0_53 = arith.constant 0 : index
    %100 = vector.load %arg4[%c2_51, %c0_52, %c0_53] : memref<6x1x64xf32, #tpu.memory_space<vmem>>, vector<1x1x64xf32>
    %101 = vector.shape_cast %100 : vector<1x1x64xf32> to vector<1x64xf32>
    %102 = vector.broadcast %101 : vector<1x64xf32> to vector<16x64xf32>
    %103 = arith.addf %99, %102 : vector<16x64xf32>
    %104 = vector.extract_strided_slice %103 {offsets = [0, 0], sizes = [16, 32], strides = [1, 1]} : vector<16x64xf32> to vector<16x32xf32>
    %105 = vector.extract_strided_slice %103 {offsets = [0, 32], sizes = [16, 32], strides = [1, 1]} : vector<16x64xf32> to vector<16x32xf32>
    %106 = arith.negf %105 : vector<16x32xf32>
    %107 = math.exp %106 : vector<16x32xf32>
    %cst_54 = arith.constant 1.000000e+00 : f32
    %108 = vector.broadcast %cst_54 : f32 to vector<16x32xf32>
    %109 = arith.addf %108, %107 : vector<16x32xf32>
    %110 = arith.divf %108, %109 : vector<16x32xf32>
    %111 = arith.mulf %104, %110 : vector<16x32xf32>
    %c1_i32_55 = arith.constant 1 : i32
    %112 = tpu.dynamic_rotate %111 by %c1_i32_55 dim 0 : vector<16x32xf32>, i32 -> vector<16x32xf32>
    %cst_56 = arith.constant 0.000000e+00 : f32
    %113 = vector.broadcast %cst_56 : f32 to vector<16x32xf32>
    %114 = arith.select %13, %112, %113 : vector<16x32xi1>, vector<16x32xf32>
    %c2_i32_57 = arith.constant 2 : i32
    %115 = tpu.dynamic_rotate %111 by %c2_i32_57 dim 0 : vector<16x32xf32>, i32 -> vector<16x32xf32>
    %cst_58 = arith.constant 0.000000e+00 : f32
    %116 = vector.broadcast %cst_58 : f32 to vector<16x32xf32>
    %117 = arith.select %15, %115, %116 : vector<16x32xi1>, vector<16x32xf32>
    %118 = arith.truncf %117 : vector<16x32xf32> to vector<16x32xbf16>
    %c9 = arith.constant 9 : index
    %c0_59 = arith.constant 0 : index
    %c0_60 = arith.constant 0 : index
    %119 = vector.load %arg3[%c9, %c0_59, %c0_60] : memref<18x32x64xbf16, #tpu.memory_space<vmem>>, vector<1x32x64xbf16>
    %120 = vector.shape_cast %119 : vector<1x32x64xbf16> to vector<32x64xbf16>
    %cst_61 = arith.constant dense<0.000000e+00> : vector<16x64xf32>
    %121 = tpu.matmul %118, %120, %cst_61 {dimension_numbers = #tpu.dot_dimension_numbers<[1], [0], [0], [1], [0, 0, 1, 1], [], []>} : vector<16x32xbf16>, vector<32x64xbf16>, vector<16x64xf32> -> vector<16x64xf32>
    %122 = arith.truncf %114 : vector<16x32xf32> to vector<16x32xbf16>
    %c10 = arith.constant 10 : index
    %c0_62 = arith.constant 0 : index
    %c0_63 = arith.constant 0 : index
    %123 = vector.load %arg3[%c10, %c0_62, %c0_63] : memref<18x32x64xbf16, #tpu.memory_space<vmem>>, vector<1x32x64xbf16>
    %124 = vector.shape_cast %123 : vector<1x32x64xbf16> to vector<32x64xbf16>
    %cst_64 = arith.constant dense<0.000000e+00> : vector<16x64xf32>
    %125 = tpu.matmul %122, %124, %cst_64 {dimension_numbers = #tpu.dot_dimension_numbers<[1], [0], [0], [1], [0, 0, 1, 1], [], []>} : vector<16x32xbf16>, vector<32x64xbf16>, vector<16x64xf32> -> vector<16x64xf32>
    %126 = arith.addf %121, %125 : vector<16x64xf32>
    %127 = arith.truncf %111 : vector<16x32xf32> to vector<16x32xbf16>
    %c11 = arith.constant 11 : index
    %c0_65 = arith.constant 0 : index
    %c0_66 = arith.constant 0 : index
    %128 = vector.load %arg3[%c11, %c0_65, %c0_66] : memref<18x32x64xbf16, #tpu.memory_space<vmem>>, vector<1x32x64xbf16>
    %129 = vector.shape_cast %128 : vector<1x32x64xbf16> to vector<32x64xbf16>
    %cst_67 = arith.constant dense<0.000000e+00> : vector<16x64xf32>
    %130 = tpu.matmul %127, %129, %cst_67 {dimension_numbers = #tpu.dot_dimension_numbers<[1], [0], [0], [1], [0, 0, 1, 1], [], []>} : vector<16x32xbf16>, vector<32x64xbf16>, vector<16x64xf32> -> vector<16x64xf32>
    %131 = arith.addf %126, %130 : vector<16x64xf32>
    %c3_68 = arith.constant 3 : index
    %c0_69 = arith.constant 0 : index
    %c0_70 = arith.constant 0 : index
    %132 = vector.load %arg4[%c3_68, %c0_69, %c0_70] : memref<6x1x64xf32, #tpu.memory_space<vmem>>, vector<1x1x64xf32>
    %133 = vector.shape_cast %132 : vector<1x1x64xf32> to vector<1x64xf32>
    %134 = vector.broadcast %133 : vector<1x64xf32> to vector<16x64xf32>
    %135 = arith.addf %131, %134 : vector<16x64xf32>
    %136 = vector.extract_strided_slice %135 {offsets = [0, 0], sizes = [16, 32], strides = [1, 1]} : vector<16x64xf32> to vector<16x32xf32>
    %137 = vector.extract_strided_slice %135 {offsets = [0, 32], sizes = [16, 32], strides = [1, 1]} : vector<16x64xf32> to vector<16x32xf32>
    %138 = arith.negf %137 : vector<16x32xf32>
    %139 = math.exp %138 : vector<16x32xf32>
    %cst_71 = arith.constant 1.000000e+00 : f32
    %140 = vector.broadcast %cst_71 : f32 to vector<16x32xf32>
    %141 = arith.addf %140, %139 : vector<16x32xf32>
    %142 = arith.divf %140, %141 : vector<16x32xf32>
    %143 = arith.mulf %136, %142 : vector<16x32xf32>
    %c1_i32_72 = arith.constant 1 : i32
    %144 = tpu.dynamic_rotate %143 by %c1_i32_72 dim 0 : vector<16x32xf32>, i32 -> vector<16x32xf32>
    %cst_73 = arith.constant 0.000000e+00 : f32
    %145 = vector.broadcast %cst_73 : f32 to vector<16x32xf32>
    %146 = arith.select %13, %144, %145 : vector<16x32xi1>, vector<16x32xf32>
    %c2_i32_74 = arith.constant 2 : i32
    %147 = tpu.dynamic_rotate %143 by %c2_i32_74 dim 0 : vector<16x32xf32>, i32 -> vector<16x32xf32>
    %cst_75 = arith.constant 0.000000e+00 : f32
    %148 = vector.broadcast %cst_75 : f32 to vector<16x32xf32>
    %149 = arith.select %15, %147, %148 : vector<16x32xi1>, vector<16x32xf32>
    %150 = arith.truncf %149 : vector<16x32xf32> to vector<16x32xbf16>
    %c12 = arith.constant 12 : index
    %c0_76 = arith.constant 0 : index
    %c0_77 = arith.constant 0 : index
    %151 = vector.load %arg3[%c12, %c0_76, %c0_77] : memref<18x32x64xbf16, #tpu.memory_space<vmem>>, vector<1x32x64xbf16>
    %152 = vector.shape_cast %151 : vector<1x32x64xbf16> to vector<32x64xbf16>
    %cst_78 = arith.constant dense<0.000000e+00> : vector<16x64xf32>
    %153 = tpu.matmul %150, %152, %cst_78 {dimension_numbers = #tpu.dot_dimension_numbers<[1], [0], [0], [1], [0, 0, 1, 1], [], []>} : vector<16x32xbf16>, vector<32x64xbf16>, vector<16x64xf32> -> vector<16x64xf32>
    %154 = arith.truncf %146 : vector<16x32xf32> to vector<16x32xbf16>
    %c13 = arith.constant 13 : index
    %c0_79 = arith.constant 0 : index
    %c0_80 = arith.constant 0 : index
    %155 = vector.load %arg3[%c13, %c0_79, %c0_80] : memref<18x32x64xbf16, #tpu.memory_space<vmem>>, vector<1x32x64xbf16>
    %156 = vector.shape_cast %155 : vector<1x32x64xbf16> to vector<32x64xbf16>
    %cst_81 = arith.constant dense<0.000000e+00> : vector<16x64xf32>
    %157 = tpu.matmul %154, %156, %cst_81 {dimension_numbers = #tpu.dot_dimension_numbers<[1], [0], [0], [1], [0, 0, 1, 1], [], []>} : vector<16x32xbf16>, vector<32x64xbf16>, vector<16x64xf32> -> vector<16x64xf32>
    %158 = arith.addf %153, %157 : vector<16x64xf32>
    %159 = arith.truncf %143 : vector<16x32xf32> to vector<16x32xbf16>
    %c14 = arith.constant 14 : index
    %c0_82 = arith.constant 0 : index
    %c0_83 = arith.constant 0 : index
    %160 = vector.load %arg3[%c14, %c0_82, %c0_83] : memref<18x32x64xbf16, #tpu.memory_space<vmem>>, vector<1x32x64xbf16>
    %161 = vector.shape_cast %160 : vector<1x32x64xbf16> to vector<32x64xbf16>
    %cst_84 = arith.constant dense<0.000000e+00> : vector<16x64xf32>
    %162 = tpu.matmul %159, %161, %cst_84 {dimension_numbers = #tpu.dot_dimension_numbers<[1], [0], [0], [1], [0, 0, 1, 1], [], []>} : vector<16x32xbf16>, vector<32x64xbf16>, vector<16x64xf32> -> vector<16x64xf32>
    %163 = arith.addf %158, %162 : vector<16x64xf32>
    %c4_85 = arith.constant 4 : index
    %c0_86 = arith.constant 0 : index
    %c0_87 = arith.constant 0 : index
    %164 = vector.load %arg4[%c4_85, %c0_86, %c0_87] : memref<6x1x64xf32, #tpu.memory_space<vmem>>, vector<1x1x64xf32>
    %165 = vector.shape_cast %164 : vector<1x1x64xf32> to vector<1x64xf32>
    %166 = vector.broadcast %165 : vector<1x64xf32> to vector<16x64xf32>
    %167 = arith.addf %163, %166 : vector<16x64xf32>
    %168 = vector.extract_strided_slice %167 {offsets = [0, 0], sizes = [16, 32], strides = [1, 1]} : vector<16x64xf32> to vector<16x32xf32>
    %169 = vector.extract_strided_slice %167 {offsets = [0, 32], sizes = [16, 32], strides = [1, 1]} : vector<16x64xf32> to vector<16x32xf32>
    %170 = arith.negf %169 : vector<16x32xf32>
    %171 = math.exp %170 : vector<16x32xf32>
    %cst_88 = arith.constant 1.000000e+00 : f32
    %172 = vector.broadcast %cst_88 : f32 to vector<16x32xf32>
    %173 = arith.addf %172, %171 : vector<16x32xf32>
    %174 = arith.divf %172, %173 : vector<16x32xf32>
    %175 = arith.mulf %168, %174 : vector<16x32xf32>
    %c1_i32_89 = arith.constant 1 : i32
    %176 = tpu.dynamic_rotate %175 by %c1_i32_89 dim 0 : vector<16x32xf32>, i32 -> vector<16x32xf32>
    %cst_90 = arith.constant 0.000000e+00 : f32
    %177 = vector.broadcast %cst_90 : f32 to vector<16x32xf32>
    %178 = arith.select %13, %176, %177 : vector<16x32xi1>, vector<16x32xf32>
    %c2_i32_91 = arith.constant 2 : i32
    %179 = tpu.dynamic_rotate %175 by %c2_i32_91 dim 0 : vector<16x32xf32>, i32 -> vector<16x32xf32>
    %cst_92 = arith.constant 0.000000e+00 : f32
    %180 = vector.broadcast %cst_92 : f32 to vector<16x32xf32>
    %181 = arith.select %15, %179, %180 : vector<16x32xi1>, vector<16x32xf32>
    %182 = arith.truncf %181 : vector<16x32xf32> to vector<16x32xbf16>
    %c15 = arith.constant 15 : index
    %c0_93 = arith.constant 0 : index
    %c0_94 = arith.constant 0 : index
    %183 = vector.load %arg3[%c15, %c0_93, %c0_94] : memref<18x32x64xbf16, #tpu.memory_space<vmem>>, vector<1x32x64xbf16>
    %184 = vector.shape_cast %183 : vector<1x32x64xbf16> to vector<32x64xbf16>
    %cst_95 = arith.constant dense<0.000000e+00> : vector<16x64xf32>
    %185 = tpu.matmul %182, %184, %cst_95 {dimension_numbers = #tpu.dot_dimension_numbers<[1], [0], [0], [1], [0, 0, 1, 1], [], []>} : vector<16x32xbf16>, vector<32x64xbf16>, vector<16x64xf32> -> vector<16x64xf32>
    %186 = arith.truncf %178 : vector<16x32xf32> to vector<16x32xbf16>
    %c16 = arith.constant 16 : index
    %c0_96 = arith.constant 0 : index
    %c0_97 = arith.constant 0 : index
    %187 = vector.load %arg3[%c16, %c0_96, %c0_97] : memref<18x32x64xbf16, #tpu.memory_space<vmem>>, vector<1x32x64xbf16>
    %188 = vector.shape_cast %187 : vector<1x32x64xbf16> to vector<32x64xbf16>
    %cst_98 = arith.constant dense<0.000000e+00> : vector<16x64xf32>
    %189 = tpu.matmul %186, %188, %cst_98 {dimension_numbers = #tpu.dot_dimension_numbers<[1], [0], [0], [1], [0, 0, 1, 1], [], []>} : vector<16x32xbf16>, vector<32x64xbf16>, vector<16x64xf32> -> vector<16x64xf32>
    %190 = arith.addf %185, %189 : vector<16x64xf32>
    %191 = arith.truncf %175 : vector<16x32xf32> to vector<16x32xbf16>
    %c17 = arith.constant 17 : index
    %c0_99 = arith.constant 0 : index
    %c0_100 = arith.constant 0 : index
    %192 = vector.load %arg3[%c17, %c0_99, %c0_100] : memref<18x32x64xbf16, #tpu.memory_space<vmem>>, vector<1x32x64xbf16>
    %193 = vector.shape_cast %192 : vector<1x32x64xbf16> to vector<32x64xbf16>
    %cst_101 = arith.constant dense<0.000000e+00> : vector<16x64xf32>
    %194 = tpu.matmul %191, %193, %cst_101 {dimension_numbers = #tpu.dot_dimension_numbers<[1], [0], [0], [1], [0, 0, 1, 1], [], []>} : vector<16x32xbf16>, vector<32x64xbf16>, vector<16x64xf32> -> vector<16x64xf32>
    %195 = arith.addf %190, %194 : vector<16x64xf32>
    %c5_102 = arith.constant 5 : index
    %c0_103 = arith.constant 0 : index
    %c0_104 = arith.constant 0 : index
    %196 = vector.load %arg4[%c5_102, %c0_103, %c0_104] : memref<6x1x64xf32, #tpu.memory_space<vmem>>, vector<1x1x64xf32>
    %197 = vector.shape_cast %196 : vector<1x1x64xf32> to vector<1x64xf32>
    %198 = vector.broadcast %197 : vector<1x64xf32> to vector<16x64xf32>
    %199 = arith.addf %195, %198 : vector<16x64xf32>
    %200 = vector.extract_strided_slice %199 {offsets = [0, 0], sizes = [16, 32], strides = [1, 1]} : vector<16x64xf32> to vector<16x32xf32>
    %201 = vector.extract_strided_slice %199 {offsets = [0, 32], sizes = [16, 32], strides = [1, 1]} : vector<16x64xf32> to vector<16x32xf32>
    %202 = arith.negf %201 : vector<16x32xf32>
    %203 = math.exp %202 : vector<16x32xf32>
    %cst_105 = arith.constant 1.000000e+00 : f32
    %204 = vector.broadcast %cst_105 : f32 to vector<16x32xf32>
    %205 = arith.addf %204, %203 : vector<16x32xf32>
    %206 = arith.divf %204, %205 : vector<16x32xf32>
    %207 = arith.mulf %200, %206 : vector<16x32xf32>
    %208 = arith.truncf %207 : vector<16x32xf32> to vector<16x32xbf16>
    %c0_106 = arith.constant 0 : index
    %c0_107 = arith.constant 0 : index
    %209 = vector.load %arg5[%c0_106, %c0_107] : memref<32x64xbf16, #tpu.memory_space<vmem>>, vector<32x64xbf16>
    %cst_108 = arith.constant dense<0.000000e+00> : vector<16x64xf32>
    %210 = tpu.matmul %208, %209, %cst_108 {dimension_numbers = #tpu.dot_dimension_numbers<[1], [0], [0], [1], [0, 0, 1, 1], [], []>} : vector<16x32xbf16>, vector<32x64xbf16>, vector<16x64xf32> -> vector<16x64xf32>
    %211 = tpu.iota {dimensions = array<i32: 0>} : vector<16x32xi32>
    %c3_i32 = arith.constant 3 : i32
    %212 = vector.broadcast %c3_i32 : i32 to vector<16x32xi32>
    %213 = arith.shrsi %211, %212 : vector<16x32xi32>
    %214 = tpu.iota {dimensions = array<i32: 1>} : vector<16x32xi32>
    %c4_i32 = arith.constant 4 : i32
    %215 = vector.broadcast %c4_i32 : i32 to vector<16x32xi32>
    %216 = arith.shrsi %214, %215 : vector<16x32xi32>
    %217 = arith.cmpi eq, %213, %216 : vector<16x32xi32>
    %cst_109 = arith.constant 0.000000e+00 : f32
    %cst_110 = arith.constant -1.000000e+09 : f32
    %218 = vector.broadcast %cst_109 : f32 to vector<16x32xf32>
    %219 = vector.broadcast %cst_110 : f32 to vector<16x32xf32>
    %220 = arith.select %217, %218, %219 : vector<16x32xi1>, vector<16x32xf32>
    %221 = arith.truncf %210 : vector<16x64xf32> to vector<16x64xbf16>
    %c0_111 = arith.constant 0 : index
    %c0_112 = arith.constant 0 : index
    %222 = vector.load %arg6[%c0_111, %c0_112] : memref<64x32xbf16, #tpu.memory_space<vmem>>, vector<64x32xbf16>
    %cst_113 = arith.constant dense<0.000000e+00> : vector<16x32xf32>
    %223 = tpu.matmul %221, %222, %cst_113 {dimension_numbers = #tpu.dot_dimension_numbers<[1], [0], [0], [1], [0, 0, 1, 1], [], []>} : vector<16x64xbf16>, vector<64x32xbf16>, vector<16x32xf32> -> vector<16x32xf32>
    %224 = arith.addf %223, %220 : vector<16x32xf32>
    %cst_114 = arith.constant dense<0xFF800000> : vector<16xf32>
    %225 = vector.multi_reduction <maximumf>, %224, %cst_114 [1] : vector<16x32xf32> to vector<16xf32>
    %226 = vector.shape_cast %225 : vector<16xf32> to vector<16x1xf32>
    %227 = vector.broadcast %226 : vector<16x1xf32> to vector<16x32xf32>
    %228 = arith.subf %224, %227 : vector<16x32xf32>
    %229 = math.exp %228 : vector<16x32xf32>
    %cst_115 = arith.constant dense<0.000000e+00> : vector<16xf32>
    %230 = vector.multi_reduction <add>, %229, %cst_115 [1] : vector<16x32xf32> to vector<16xf32>
    %231 = vector.shape_cast %230 : vector<16xf32> to vector<16x1xf32>
    %232 = tpu.reciprocal %231 {approx = true} : vector<16x1xf32> -> vector<16x1xf32>
    %233 = vector.broadcast %232 : vector<16x1xf32> to vector<16x32xf32>
    %234 = arith.mulf %229, %233 : vector<16x32xf32>
    %235 = arith.truncf %234 : vector<16x32xf32> to vector<16x32xbf16>
    %c0_116 = arith.constant 0 : index
    %c0_117 = arith.constant 0 : index
    %236 = vector.load %arg7[%c0_116, %c0_117] : memref<32x64xbf16, #tpu.memory_space<vmem>>, vector<32x64xbf16>
    %cst_118 = arith.constant dense<0.000000e+00> : vector<16x64xf32>
    %237 = tpu.matmul %235, %236, %cst_118 {dimension_numbers = #tpu.dot_dimension_numbers<[1], [0], [0], [1], [0, 0, 1, 1], [], []>} : vector<16x32xbf16>, vector<32x64xbf16>, vector<16x64xf32> -> vector<16x64xf32>
    %238 = arith.truncf %237 : vector<16x64xf32> to vector<16x64xbf16>
    %c0_119 = arith.constant 0 : index
    %c0_120 = arith.constant 0 : index
    %239 = vector.load %arg8[%c0_119, %c0_120] : memref<64x128xbf16, #tpu.memory_space<vmem>>, vector<64x128xbf16>
    %cst_121 = arith.constant dense<0.000000e+00> : vector<16x128xf32>
    %240 = tpu.matmul %238, %239, %cst_121 {dimension_numbers = #tpu.dot_dimension_numbers<[1], [0], [0], [1], [0, 0, 1, 1], [], []>} : vector<16x64xbf16>, vector<64x128xbf16>, vector<16x128xf32> -> vector<16x128xf32>
    %c0_122 = arith.constant 0 : index
    %c0_123 = arith.constant 0 : index
    %241 = vector.load %arg9[%c0_122, %c0_123] : memref<32x128xbf16, #tpu.memory_space<vmem>>, vector<32x128xbf16>
    %cst_124 = arith.constant dense<0.000000e+00> : vector<16x128xf32>
    %242 = tpu.matmul %208, %241, %cst_124 {dimension_numbers = #tpu.dot_dimension_numbers<[1], [0], [0], [1], [0, 0, 1, 1], [], []>} : vector<16x32xbf16>, vector<32x128xbf16>, vector<16x128xf32> -> vector<16x128xf32>
    %243 = arith.addf %240, %242 : vector<16x128xf32>
    %c0_125 = arith.constant 0 : index
    %c0_126 = arith.constant 0 : index
    %244 = vector.load %arg10[%c0_125, %c0_126] : memref<1x128xf32, #tpu.memory_space<vmem>>, vector<1x128xf32>
    %245 = vector.broadcast %244 : vector<1x128xf32> to vector<16x128xf32>
    %246 = arith.addf %243, %245 : vector<16x128xf32>
    %cst_127 = arith.constant 1.000000e-01 : f32
    %247 = vector.broadcast %cst_127 : f32 to vector<16x128xf32>
    %248 = arith.mulf %247, %246 : vector<16x128xf32>
    %249 = arith.maximumf %246, %248 : vector<16x128xf32>
    %250 = arith.truncf %249 : vector<16x128xf32> to vector<16x128xbf16>
    %c0_128 = arith.constant 0 : index
    %c0_129 = arith.constant 0 : index
    %251 = vector.load %arg11[%c0_128, %c0_129] : memref<128x128xbf16, #tpu.memory_space<vmem>>, vector<128x128xbf16>
    %cst_130 = arith.constant dense<0.000000e+00> : vector<16x128xf32>
    %252 = tpu.matmul %250, %251, %cst_130 {dimension_numbers = #tpu.dot_dimension_numbers<[1], [0], [0], [1], [0, 0, 1, 1], [], []>} : vector<16x128xbf16>, vector<128x128xbf16>, vector<16x128xf32> -> vector<16x128xf32>
    %cst_131 = arith.constant dense<0xFF800000> : vector<16xf32>
    %253 = vector.multi_reduction <maximumf>, %252, %cst_131 [1] : vector<16x128xf32> to vector<16xf32>
    %254 = vector.shape_cast %253 : vector<16xf32> to vector<16x1xf32>
    %255 = vector.broadcast %254 : vector<16x1xf32> to vector<16x128xf32>
    %256 = arith.subf %252, %255 : vector<16x128xf32>
    %257 = math.exp %256 : vector<16x128xf32>
    %cst_132 = arith.constant dense<0.000000e+00> : vector<16xf32>
    %258 = vector.multi_reduction <add>, %257, %cst_132 [1] : vector<16x128xf32> to vector<16xf32>
    %259 = vector.shape_cast %258 : vector<16xf32> to vector<16x1xf32>
    %260 = math.log %259 : vector<16x1xf32>
    %261 = arith.addf %254, %260 : vector<16x1xf32>
    %262 = vector.broadcast %261 : vector<16x1xf32> to vector<16x128xf32>
    %263 = arith.subf %252, %262 : vector<16x128xf32>
    %c0_133 = arith.constant 0 : index
    %c0_134 = arith.constant 0 : index
    %264 = vector.load %arg12[%c0_133, %c0_134] : memref<16x128xf32, #tpu.memory_space<vmem>>, vector<16x128xf32>
    tpu.vector_store %arg12[%c0_133, %c0_134], %263 {strides = array<i32>} : memref<16x128xf32, #tpu.memory_space<vmem>>, vector<16x128xf32>,
    return
  }
  func.func @transform_0(%arg0: i32) -> (i32, i32) {
    %c0_i32 = arith.constant 0 : i32
    %c0_i32_0 = arith.constant 0 : i32
    %c0_i32_1 = arith.constant 0 : i32
    return %c0_i32, %c0_i32_0 : i32, i32
  }
  func.func @transform_1(%arg0: i32) -> (i32, i32) {
    %c0_i32 = arith.constant 0 : i32
    %c0_i32_0 = arith.constant 0 : i32
    %c0_i32_1 = arith.constant 0 : i32
    return %c0_i32, %c0_i32_0 : i32, i32
  }
  func.func @transform_2(%arg0: i32) -> (i32, i32, i32) {
    %c0_i32 = arith.constant 0 : i32
    %c0_i32_0 = arith.constant 0 : i32
    %c0_i32_1 = arith.constant 0 : i32
    %c0_i32_2 = arith.constant 0 : i32
    return %c0_i32, %c0_i32_0, %c0_i32_1 : i32, i32, i32
  }
  func.func @transform_3(%arg0: i32) -> (i32, i32, i32) {
    %c0_i32 = arith.constant 0 : i32
    %c0_i32_0 = arith.constant 0 : i32
    %c0_i32_1 = arith.constant 0 : i32
    %c0_i32_2 = arith.constant 0 : i32
    return %c0_i32, %c0_i32_0, %c0_i32_1 : i32, i32, i32
  }
  func.func @transform_4(%arg0: i32) -> (i32, i32) {
    %c0_i32 = arith.constant 0 : i32
    %c0_i32_0 = arith.constant 0 : i32
    %c0_i32_1 = arith.constant 0 : i32
    return %c0_i32, %c0_i32_0 : i32, i32
  }
  func.func @transform_5(%arg0: i32) -> (i32, i32) {
    %c0_i32 = arith.constant 0 : i32
    %c0_i32_0 = arith.constant 0 : i32
    %c0_i32_1 = arith.constant 0 : i32
    return %c0_i32, %c0_i32_0 : i32, i32
  }
  func.func @transform_6(%arg0: i32) -> (i32, i32) {
    %c0_i32 = arith.constant 0 : i32
    %c0_i32_0 = arith.constant 0 : i32
    %c0_i32_1 = arith.constant 0 : i32
    return %c0_i32, %c0_i32_0 : i32, i32
  }
  func.func @transform_7(%arg0: i32) -> (i32, i32) {
    %c0_i32 = arith.constant 0 : i32
    %c0_i32_0 = arith.constant 0 : i32
    %c0_i32_1 = arith.constant 0 : i32
    return %c0_i32, %c0_i32_0 : i32, i32
  }
  func.func @transform_8(%arg0: i32) -> (i32, i32) {
    %c0_i32 = arith.constant 0 : i32
    %c0_i32_0 = arith.constant 0 : i32
    %c0_i32_1 = arith.constant 0 : i32
    return %c0_i32, %c0_i32_0 : i32, i32
  }
  func.func @transform_9(%arg0: i32) -> (i32, i32) {
    %c0_i32 = arith.constant 0 : i32
    %c0_i32_0 = arith.constant 0 : i32
    %c0_i32_1 = arith.constant 0 : i32
    return %c0_i32, %c0_i32_0 : i32, i32
  }
  func.func @transform_10(%arg0: i32) -> (i32, i32) {
    %c0_i32 = arith.constant 0 : i32
    %c0_i32_0 = arith.constant 0 : i32
    %c0_i32_1 = arith.constant 0 : i32
    return %c0_i32, %c0_i32_0 : i32, i32
  }
  func.func @transform_11(%arg0: i32) -> (i32, i32) {
    %c0_i32 = arith.constant 0 : i32
    %c0_i32_0 = arith.constant 0 : i32
    %c0_i32_1 = arith.constant 0 : i32
    return %c0_i32, %c0_i32_0 : i32, i32
  }
}

</mosaic_0001>

<llo_original>
// kernel: cnn_cnn_ce_forward.1
$region0: #{cnn_cnn_ce_forward.1}
  #allocation0 [shape = 'u32[]', space=smem, size = 0x4, offset = 0x4, fixed_abs, tag = 'smem constant byte address 0x4 - core index']
  #allocation1 [shape = 'u32[144,128]{1,0:T(1,128)}', space=vmem, size = 0x12000, scoped, tag = 'internal scratch']
  %s0 = inlined_call_operand.vmem [shape: s32[16,1], index: 0, kind: input, shape index: {}]
  %s1 = inlined_call_operand.vmem [shape: bf16[128,32], index: 1, kind: input, shape index: {}]
  %s2 = inlined_call_operand.hbm [shape: bf16[18,32,64], index: 2, kind: input, shape index: {}]
  %s3 = inlined_call_operand.vmem [shape: f32[6,1,64], index: 3, kind: input, shape index: {}]
  %s4 = inlined_call_operand.vmem [shape: bf16[32,64], index: 4, kind: input, shape index: {}]
  %s5 = inlined_call_operand.vmem [shape: bf16[64,32], index: 5, kind: input, shape index: {}]
  %s6 = inlined_call_operand.vmem [shape: bf16[32,64], index: 6, kind: input, shape index: {}]
  %s7 = inlined_call_operand.vmem [shape: bf16[64,128], index: 7, kind: input, shape index: {}]
  %s8 = inlined_call_operand.vmem [shape: bf16[32,128], index: 8, kind: input, shape index: {}]
  %s9 = inlined_call_operand.vmem [shape: f32[1,128], index: 9, kind: input, shape index: {}]
  %s10 = inlined_call_operand.vmem [shape: bf16[128,128], index: 10, kind: input, shape index: {}]
  %s11 = inlined_call_operand.hbm [shape: f32[16,128], index: 11, kind: output, shape index: {}]
  %s12 = sld [smem:[#allocation0]]
  $region58: #{cnn_cnn_ce_forward.1} parent=0
    _
  %s14 = ssub.s32 1, %s12
  %s15 = scalar_select 0, %s14, %s12
  $region1: #{cnn_cnn_ce_forward.1} parent=0
    #allocation2 [shape = 'u8[147456]{0}', space=vmem, size = 0x24000, scoped, tag = 'input window, operand 2, single buffered']
    #allocation3 [shape = 's32[1]{0}', space=sflag, size = 0x4, scoped, tag = 'scoped memory for cnn_cnn_ce_forward.1']
    #allocation4 [shape = 's32[1]{0}', space=sflag, size = 0x4, scoped, tag = 'scoped memory for cnn_cnn_ce_forward.1']
    #allocation5 [shape = 'u8[8192]{0}', space=vmem, size = 0x2000, scoped, tag = 'output window, operand 0, single buffered']
    %16 = vsyncpa [#allocation3], 0
    %17 = vsyncpa [#allocation4], 0
    // Predicated region
    $region2: #{cnn_cnn_ce_forward.1} parent=1 // pred_check
      _
    $region3: #{cnn_cnn_ce_forward.1} parent=1 // pred_check_branch
      %19 = sbr.rel (0) target = $region5
    $region4: #{cnn_cnn_ce_forward.1} parent=1 // pred_region
      _
    $region5: #{cnn_cnn_ce_forward.1} parent=1 // pred_fallthru
      _
    // Predicated region
    $region6: #{cnn_cnn_ce_forward.1} parent=1 // pred_check
      _
    $region7: #{cnn_cnn_ce_forward.1} parent=1 // pred_check_branch
      %21 = sbr.rel (0) target = $region9
    $region8: #{cnn_cnn_ce_forward.1} parent=1 // pred_region
      _
    $region9: #{cnn_cnn_ce_forward.1} parent=1 // pred_fallthru
      _
    // Predicated region
    $region10: #{cnn_cnn_ce_forward.1} parent=1 // pred_check
      _
    $region11: #{cnn_cnn_ce_forward.1} parent=1 // pred_check_branch
      %23 = sbr.rel (0) target = $region13
    $region12: #{cnn_cnn_ce_forward.1} parent=1 // pred_region
      %s25 = ssub.s32 4608, 4608
      %26 = vsyncadd [#allocation3], %s25
      %s27 = sshll.u32 [#allocation2], 4
      %s28 = int_to_ptr.vmem [resolvable:$true] %s27
      %33 = dma.hbm_to_vmem [thread:$0]  %s2, 4608, %s28, [#allocation3], 64, 64, 4
    $region13: #{cnn_cnn_ce_forward.1} parent=1 // pred_fallthru
      _
    // Predicated region
    $region14: #{cnn_cnn_ce_forward.1} parent=1 // pred_check
      _
    $region15: #{cnn_cnn_ce_forward.1} parent=1 // pred_check_branch
      %35 = sbr.rel (0) target = $region17
    $region16: #{cnn_cnn_ce_forward.1} parent=1 // pred_region
      _
    $region17: #{cnn_cnn_ce_forward.1} parent=1 // pred_fallthru
      _
    // Predicated region
    $region18: #{cnn_cnn_ce_forward.1} parent=1 // pred_check
      _
    $region19: #{cnn_cnn_ce_forward.1} parent=1 // pred_check_branch
      %37 = sbr.rel (0) target = $region21
    $region20: #{cnn_cnn_ce_forward.1} parent=1 // pred_region
      _
    $region21: #{cnn_cnn_ce_forward.1} parent=1 // pred_fallthru
      _
    // Predicated region
    $region22: #{cnn_cnn_ce_forward.1} parent=1 // pred_check
      _
    $region23: #{cnn_cnn_ce_forward.1} parent=1 // pred_check_branch
      %39 = sbr.rel (0) target = $region25
    $region24: #{cnn_cnn_ce_forward.1} parent=1 // pred_region
      _
    $region25: #{cnn_cnn_ce_forward.1} parent=1 // pred_fallthru
      _
    // Predicated region
    $region26: #{cnn_cnn_ce_forward.1} parent=1 // pred_check
      _
    $region27: #{cnn_cnn_ce_forward.1} parent=1 // pred_check_branch
      %41 = sbr.rel (0) target = $region29
    $region28: #{cnn_cnn_ce_forward.1} parent=1 // pred_region
      _
    $region29: #{cnn_cnn_ce_forward.1} parent=1 // pred_fallthru
      _
    // Predicated region
    $region30: #{cnn_cnn_ce_forward.1} parent=1 // pred_check
      _
    $region31: #{cnn_cnn_ce_forward.1} parent=1 // pred_check_branch
      %43 = sbr.rel (0) target = $region33
    $region32: #{cnn_cnn_ce_forward.1} parent=1 // pred_region
      _
    $region33: #{cnn_cnn_ce_forward.1} parent=1 // pred_fallthru
      _
    // Predicated region
    $region34: #{cnn_cnn_ce_forward.1} parent=1 // pred_check
      _
    $region35: #{cnn_cnn_ce_forward.1} parent=1 // pred_check_branch
      %45 = sbr.rel (0) target = $region37
    $region36: #{cnn_cnn_ce_forward.1} parent=1 // pred_region
      _
    $region37: #{cnn_cnn_ce_forward.1} parent=1 // pred_fallthru
      _
    // Predicated region
    $region38: #{cnn_cnn_ce_forward.1} parent=1 // pred_check
      _
    $region39: #{cnn_cnn_ce_forward.1} parent=1 // pred_check_branch
      %47 = sbr.rel (0) target = $region41
    $region40: #{cnn_cnn_ce_forward.1} parent=1 // pred_region
      _
    $region41: #{cnn_cnn_ce_forward.1} parent=1 // pred_fallthru
      _
    // Predicated region
    $region42: #{cnn_cnn_ce_forward.1} parent=1 // pred_check
      _
    $region43: #{cnn_cnn_ce_forward.1} parent=1 // pred_check_branch
      %49 = sbr.rel (0) target = $region45
    $region44: #{cnn_cnn_ce_forward.1} parent=1 // pred_region
      _
    $region45: #{cnn_cnn_ce_forward.1} parent=1 // pred_fallthru
      _
    // Predicated region
    $region46: #{cnn_cnn_ce_forward.1} parent=1 // pred_check
      _
    $region47: #{cnn_cnn_ce_forward.1} parent=1 // pred_check_branch
      %51 = sbr.rel (0) target = $region49
    $region48: #{cnn_cnn_ce_forward.1} parent=1 // pred_region
      %52 = dma.done [#allocation3], 4608
    $region49: #{cnn_cnn_ce_forward.1} parent=1 // pred_fallthru
      _
    %v54 = vld [vmem:[%s0] sm:$0xff]
    %v55 = vld [vmem:[%s0 + $0x8] sm:$0xff]
    %v56 = vlaneseq
    %v57 = vand.u32 %v56, 127
    %58 = vset.pattern.permute.xlu0 0
    %59 = vperm.xlu0 %58, %v54
    %v60 = vpop.permute.xlu0 %59
    %61 = vset.pattern.permute.xlu0 0
    %62 = vperm.xlu0 %61, %v55
    %v63 = vpop.permute.xlu0 %62
    %vm64 = vcmp.eq.s32.totalorder %v57, %v60
    %vm65 = vcmp.eq.s32.totalorder %v57, %v63
    %v66 = vsel %vm64, 1, 0
    %v67 = vsel %vm65, 1, 0
    %v68 = vcvt.s32.f32 %v66
    %v69 = vcvt.s32.f32 %v67
    %v70 = vpack.c.bf16 %v69, %v68
    %v71 = vld [vmem:[%s1] sm:$0xf]
    %v72 = vld [vmem:[%s1 + $0x4] sm:$0xf]
    %v73 = vld [vmem:[%s1 + $0x8] sm:$0xf]
    %v74 = vld [vmem:[%s1 + $0xc] sm:$0xf]
    %v75 = vld [vmem:[%s1 + $0x10] sm:$0xf]
    %v76 = vld [vmem:[%s1 + $0x14] sm:$0xf]
    %v77 = vld [vmem:[%s1 + $0x18] sm:$0xf]
    %v78 = vld [vmem:[%s1 + $0x1c] sm:$0xf]
    %v79 = vld [vmem:[%s1 + $0x20] sm:$0xf]
    %v80 = vld [vmem:[%s1 + $0x24] sm:$0xf]
    %v81 = vld [vmem:[%s1 + $0x28] sm:$0xf]
    %v82 = vld [vmem:[%s1 + $0x2c] sm:$0xf]
    %v83 = vld [vmem:[%s1 + $0x30] sm:$0xf]
    %v84 = vld [vmem:[%s1 + $0x34] sm:$0xf]
    %v85 = vld [vmem:[%s1 + $0x38] sm:$0xf]
    %v86 = vld [vmem:[%s1 + $0x3c] sm:$0xf]
    %v103 = vunpack.c.l.b16 %v71
    %v104 = vunpack.c.l.b16 %v72
    %v105 = vunpack.c.l.b16 %v73
    %v106 = vunpack.c.l.b16 %v74
    %v107 = vunpack.c.l.b16 %v75
    %v108 = vunpack.c.l.b16 %v76
    %v109 = vunpack.c.l.b16 %v77
    %v110 = vunpack.c.l.b16 %v78
    %v111 = vunpack.c.l.b16 %v79
    %v112 = vunpack.c.l.b16 %v80
    %v113 = vunpack.c.l.b16 %v81
    %v114 = vunpack.c.l.b16 %v82
    %v115 = vunpack.c.l.b16 %v83
    %v116 = vunpack.c.l.b16 %v84
    %v117 = vunpack.c.l.b16 %v85
    %v118 = vunpack.c.l.b16 %v86
    %v119 = vpack.c.b16 %v104, %v103
    %v120 = vpack.c.b16 %v106, %v105
    %v121 = vpack.c.b16 %v108, %v107
    %v122 = vpack.c.b16 %v110, %v109
    %v123 = vpack.c.b16 %v112, %v111
    %v124 = vpack.c.b16 %v114, %v113
    %v125 = vpack.c.b16 %v116, %v115
    %v126 = vpack.c.b16 %v118, %v117
    %135 = vmatprep.subr.bf16.mxu0 0
    %136 = vmatpush1.bf16.msra.mxu0 %v119
    %137 = vmatprep.subr.bf16.mxu0 0
    %138 = vmatpush1.bf16.msra.mxu0 %v120
    %139 = vmatprep.subr.bf16.mxu0 0
    %140 = vmatpush1.bf16.msra.mxu0 %v121
    %141 = vmatprep.subr.bf16.mxu0 0
    %142 = vmatpush1.bf16.msra.mxu0 %v122
    %143 = vmatprep.subr.bf16.mxu0 0
    %144 = vmatpush1.bf16.msra.mxu0 %v123
    %145 = vmatprep.subr.bf16.mxu0 0
    %146 = vmatpush1.bf16.msra.mxu0 %v124
    %147 = vmatprep.subr.bf16.mxu0 0
    %148 = vmatpush1.bf16.msra.mxu0 %v125
    %149 = vmatprep.subr.bf16.mxu0 0
    %150 = vmatpush1.bf16.msra.mxu0 %v126
    %151 = vmatprep.subr.bf16.mxu0 0
    %152 = vmatpush1.bf16.msra.mxu0 0
    %153 = vmatprep.subr.bf16.mxu0 0
    %154 = vmatpush1.bf16.msra.mxu0 0
    %155 = vmatprep.subr.bf16.mxu0 0
    %156 = vmatpush1.bf16.msra.mxu0 0
    %157 = vmatprep.subr.bf16.mxu0 0
    %158 = vmatpush1.bf16.msra.mxu0 0
    %159 = vmatprep.subr.bf16.mxu0 0
    %160 = vmatpush1.bf16.msra.mxu0 0
    %161 = vmatprep.subr.bf16.mxu0 0
    %162 = vmatpush1.bf16.msra.mxu0 0
    %163 = vmatprep.subr.bf16.mxu0 0
    %164 = vmatpush1.bf16.msra.mxu0 0
    %165 = vmatprep.subr.bf16.mxu0 0
    %166 = vmatpush1.bf16.msra.mxu0 0
    %167 = vmatprep.mubr.bf16.mxu0 0
    %168 = vmatmul.mubr.bf16.gmra.mrb[0].mxu0 %v70
    %v169 = vpop.f32.mrb[0].mxu0
    %v170 = vadd.f32 0.0, %v169
    %v171 = vpop.f32.mrb[0].mxu0
    %v172 = vpop.f32.mrb[0].mxu0
    %v173 = vadd.f32 0.0, %v172
    %v174 = vpop.f32.mrb[0].mxu0
    %175 = vdwg.mxu0
    %v176 = vlaneseq
    %v177 = vshrl.u32 %v176, 7
    %v178 = vadd.s32 %v177, 8
    %v179 = vand.u32 %v177, 7
    %v180 = vand.u32 %v178, 7
    %vm181 = vcmp.ge.s32.totalorder %v179, 1
    %vm182 = vcmp.ge.s32.totalorder %v180, 1
    %vm183 = vcmp.ge.s32.totalorder %v179, 2
    %vm184 = vcmp.ge.s32.totalorder %v180, 2
    %v185 = vrot.slane %v170, 7
    %v186 = vrot.slane %v173, 7
    %vm187 = vcmp.lt.s32.totalorder %v177, 1
    %v188 = vsel %vm187, %v185, %v186
    %v189 = vsel %vm187, %v186, %v185
    %v190 = vsel %vm181, %v189, 0.0
    %v191 = vsel %vm182, %v188, 0.0
    %v192 = vrot.slane %v170, 6
    %v193 = vrot.slane %v173, 6
    %vm194 = vcmp.lt.s32.totalorder %v177, 2
    %v195 = vsel %vm194, %v192, %v193
    %v196 = vsel %vm194, %v193, %v192
    %v197 = vsel %vm183, %v196, 0.0
    %v198 = vsel %vm184, %v195, 0.0
    %v199 = vpack.c.bf16 %v198, %v197
    %v200 = vld [vmem:[#allocation2] sm:$0xf]
    %v201 = vld [vmem:[#allocation2 + $0x4] sm:$0xf]
    %v202 = vld [vmem:[#allocation2 + $0x8] sm:$0xf]
    %v203 = vld [vmem:[#allocation2 + $0xc] sm:$0xf]
    %v204 = vpack.c.bf16 %v191, %v190
    %s205 = scalar_lea.vmem [#allocation2], 16
    %v206 = vld [vmem:[%s205] sm:$0xf]
    %v207 = vld [vmem:[%s205 + $0x4] sm:$0xf]
    %v208 = vld [vmem:[%s205 + $0x8] sm:$0xf]
    %v209 = vld [vmem:[%s205 + $0xc] sm:$0xf]
    %v214 = vunpack.c.l.b16 %v206
    %v215 = vunpack.c.l.b16 %v207
    %v216 = vunpack.c.l.b16 %v208
    %v217 = vunpack.c.l.b16 %v209
    %v218 = vpack.c.b16 %v215, %v214
    %v219 = vpack.c.b16 %v217, %v216
    %vm222 = vcmask 261120
    %v224 = vsel %vm222, %v204, 0
    %226 = vmatprep.subr.bf16.mxu0 0
    %227 = vmatpush1.bf16.msra.mxu0 %v218
    %228 = vmatprep.subr.bf16.mxu0 0
    %229 = vmatpush1.bf16.msra.mxu0 %v219
    %230 = vmatprep.subr.bf16.mxu0 0
    %231 = vmatpush1.bf16.msra.mxu0 0
    %232 = vmatprep.subr.bf16.mxu0 0
    %233 = vmatpush1.bf16.msra.mxu0 0
    %234 = vmatprep.subr.bf16.mxu0 0
    %235 = vmatpush1.bf16.msra.mxu0 0
    %236 = vmatprep.subr.bf16.mxu0 0
    %237 = vmatpush1.bf16.msra.mxu0 0
    %238 = vmatprep.subr.bf16.mxu0 0
    %239 = vmatpush1.bf16.msra.mxu0 0
    %240 = vmatprep.subr.bf16.mxu0 0
    %241 = vmatpush1.bf16.msra.mxu0 0
    %242 = vmatprep.subr.bf16.mxu0 0
    %243 = vmatpush1.bf16.msra.mxu0 0
    %244 = vmatprep.subr.bf16.mxu0 0
    %245 = vmatpush1.bf16.msra.mxu0 0
    %246 = vmatprep.subr.bf16.mxu0 0
    %247 = vmatpush1.bf16.msra.mxu0 0
    %248 = vmatprep.subr.bf16.mxu0 0
    %249 = vmatpush1.bf16.msra.mxu0 0
    %250 = vmatprep.subr.bf16.mxu0 0
    %251 = vmatpush1.bf16.msra.mxu0 0
    %252 = vmatprep.subr.bf16.mxu0 0
    %253 = vmatpush1.bf16.msra.mxu0 0
    %254 = vmatprep.subr.bf16.mxu0 0
    %255 = vmatpush1.bf16.msra.mxu0 0
    %256 = vmatprep.subr.bf16.mxu0 0
    %257 = vmatpush1.bf16.msra.mxu0 0
    %258 = vmatprep.mubr.bf16.mxu0 0
    %259 = vmatmul.mubr.bf16.gmra.mrb[0].mxu0 %v224
    %v260 = vpop.f32.mrb[0].mxu0
    %v261 = vadd.f32 0.0, %v260
    %v262 = vpop.f32.mrb[0].mxu0
    %v263 = vpop.f32.mrb[0].mxu0
    %v264 = vadd.f32 0.0, %v263
    %v265 = vpop.f32.mrb[0].mxu0
    %266 = vdwg.mxu0
    %v271 = vunpack.c.l.b16 %v200
    %v272 = vunpack.c.l.b16 %v201
    %v273 = vunpack.c.l.b16 %v202
    %v274 = vunpack.c.l.b16 %v203
    %v275 = vpack.c.b16 %v272, %v271
    %v276 = vpack.c.b16 %v274, %v273
    %v280 = vsel %vm222, %v199, 0
    %282 = vmatprep.subr.bf16.mxu0 0
    %283 = vmatpush1.bf16.msra.mxu0 %v275
    %284 = vmatprep.subr.bf16.mxu0 0
    %285 = vmatpush1.bf16.msra.mxu0 %v276
    %286 = vmatprep.subr.bf16.mxu0 0
    %287 = vmatpush1.bf16.msra.mxu0 0
    %288 = vmatprep.subr.bf16.mxu0 0
    %289 = vmatpush1.bf16.msra.mxu0 0
    %290 = vmatprep.subr.bf16.mxu0 0
    %291 = vmatpush1.bf16.msra.mxu0 0
    %292 = vmatprep.subr.bf16.mxu0 0
    %293 = vmatpush1.bf16.msra.mxu0 0
    %294 = vmatprep.subr.bf16.mxu0 0
    %295 = vmatpush1.bf16.msra.mxu0 0
    %296 = vmatprep.subr.bf16.mxu0 0
    %297 = vmatpush1.bf16.msra.mxu0 0
    %298 = vmatprep.subr.bf16.mxu0 0
    %299 = vmatpush1.bf16.msra.mxu0 0
    %300 = vmatprep.subr.bf16.mxu0 0
    %301 = vmatpush1.bf16.msra.mxu0 0
    %302 = vmatprep.subr.bf16.mxu0 0
    %303 = vmatpush1.bf16.msra.mxu0 0
    %304 = vmatprep.subr.bf16.mxu0 0
    %305 = vmatpush1.bf16.msra.mxu0 0
    %306 = vmatprep.subr.bf16.mxu0 0
    %307 = vmatpush1.bf16.msra.mxu0 0
    %308 = vmatprep.subr.bf16.mxu0 0
    %309 = vmatpush1.bf16.msra.mxu0 0
    %310 = vmatprep.subr.bf16.mxu0 0
    %311 = vmatpush1.bf16.msra.mxu0 0
    %312 = vmatprep.subr.bf16.mxu0 0
    %313 = vmatpush1.bf16.msra.mxu0 0
    %314 = vmatprep.mubr.bf16.mxu0 0
    %315 = vmatmul.mubr.bf16.gmra.mrb[0].mxu0 %v280
    %v316 = vpop.f32.mrb[0].mxu0
    %v317 = vadd.f32 %v261, %v316
    %v318 = vpop.f32.mrb[0].mxu0
    %v319 = vpop.f32.mrb[0].mxu0
    %v320 = vadd.f32 %v264, %v319
    %v321 = vpop.f32.mrb[0].mxu0
    %322 = vdwg.mxu0
    %v323 = vpack.c.bf16 %v173, %v170
    %s324 = scalar_lea.vmem [#allocation2], 32
    %v325 = vld [vmem:[%s324] sm:$0xf]
    %v326 = vld [vmem:[%s324 + $0x4] sm:$0xf]
    %v327 = vld [vmem:[%s324 + $0x8] sm:$0xf]
    %v328 = vld [vmem:[%s324 + $0xc] sm:$0xf]
    %v333 = vunpack.c.l.b16 %v325
    %v334 = vunpack.c.l.b16 %v326
    %v335 = vunpack.c.l.b16 %v327
    %v336 = vunpack.c.l.b16 %v328
    %v337 = vpack.c.b16 %v334, %v333
    %v338 = vpack.c.b16 %v336, %v335
    %v342 = vsel %vm222, %v323, 0
    %344 = vmatprep.subr.bf16.mxu0 0
    %345 = vmatpush1.bf16.msra.mxu0 %v337
    %346 = vmatprep.subr.bf16.mxu0 0
    %347 = vmatpush1.bf16.msra.mxu0 %v338
    %348 = vmatprep.subr.bf16.mxu0 0
    %349 = vmatpush1.bf16.msra.mxu0 0
    %350 = vmatprep.subr.bf16.mxu0 0
    %351 = vmatpush1.bf16.msra.mxu0 0
    %352 = vmatprep.subr.bf16.mxu0 0
    %353 = vmatpush1.bf16.msra.mxu0 0
    %354 = vmatprep.subr.bf16.mxu0 0
    %355 = vmatpush1.bf16.msra.mxu0 0
    %356 = vmatprep.subr.bf16.mxu0 0
    %357 = vmatpush1.bf16.msra.mxu0 0
    %358 = vmatprep.subr.bf16.mxu0 0
    %359 = vmatpush1.bf16.msra.mxu0 0
    %360 = vmatprep.subr.bf16.mxu0 0
    %361 = vmatpush1.bf16.msra.mxu0 0
    %362 = vmatprep.subr.bf16.mxu0 0
    %363 = vmatpush1.bf16.msra.mxu0 0
    %364 = vmatprep.subr.bf16.mxu0 0
    %365 = vmatpush1.bf16.msra.mxu0 0
    %366 = vmatprep.subr.bf16.mxu0 0
    %367 = vmatpush1.bf16.msra.mxu0 0
    %368 = vmatprep.subr.bf16.mxu0 0
    %369 = vmatpush1.bf16.msra.mxu0 0
    %370 = vmatprep.subr.bf16.mxu0 0
    %371 = vmatpush1.bf16.msra.mxu0 0
    %372 = vmatprep.subr.bf16.mxu0 0
    %373 = vmatpush1.bf16.msra.mxu0 0
    %374 = vmatprep.subr.bf16.mxu0 0
    %375 = vmatpush1.bf16.msra.mxu0 0
    %376 = vmatprep.mubr.bf16.mxu0 0
    %377 = vmatmul.mubr.bf16.gmra.mrb[0].mxu0 %v342
    %v378 = vpop.f32.mrb[0].mxu0
    %v379 = vadd.f32 0.0, %v378
    %v380 = vpop.f32.mrb[0].mxu0
    %v381 = vpop.f32.mrb[0].mxu0
    %v382 = vadd.f32 0.0, %v381
    %v383 = vpop.f32.mrb[0].mxu0
    %384 = vdwg.mxu0
    %v385 = vadd.f32 %v317, %v379
    %v386 = vadd.f32 %v320, %v382
    %v387 = vld [vmem:[%s3] sm:$0x1]
    %v389 = vlaneseq
    %v390 = vshrl.u32 %v389, 7
    %v391 = vsub.s32 0, %v390
    %v392 = vrot.slane %v387, %v391
    %v394 = vadd.f32 %v385, %v392
    %v395 = vadd.f32 %v386, %v392
    %v396 = vxor.u32 %v394, 2147483648
    %v397 = vxor.u32 %v395, 2147483648
    %v398 = vmul.f32 %v396, 1.442695
    %v399 = vpow.pop %v398
    %v400 = vmul.f32 %v397, 1.442695
    %v401 = vpow.pop %v400
    %v402 = vadd.f32 %v399, 1.0
    %v403 = vadd.f32 %v401, 1.0
    %v404 = vrcp.pop %v402
    %v405 = vmul.f32 1.0, %v404
    %v406 = vrcp.pop %v403
    %v407 = vmul.f32 1.0, %v406
    %410 = vrot.lane.b32.xlu0 %v405, 96
    %v411 = vpop.permute.xlu0 %410
    %412 = vrot.lane.b32.xlu0 %v407, 96
    %v413 = vpop.permute.xlu0 %412
    %v416 = vmul.f32 %v394, %v411
    %v417 = vmul.f32 %v395, %v413
    %v418 = vrot.slane %v416, 7
    %v419 = vrot.slane %v417, 7
    %v420 = vsel %vm187, %v418, %v419
    %v421 = vsel %vm187, %v419, %v418
    %v422 = vsel %vm181, %v421, 0.0
    %v423 = vsel %vm182, %v420, 0.0
    %v424 = vrot.slane %v416, 6
    %v425 = vrot.slane %v417, 6
    %v426 = vsel %vm194, %v424, %v425
    %v427 = vsel %vm194, %v425, %v424
    %v428 = vsel %vm183, %v427, 0.0
    %v429 = vsel %vm184, %v426, 0.0
    %v430 = vpack.c.bf16 %v429, %v428
    %s431 = scalar_lea.vmem [#allocation2], 48
    %v432 = vld [vmem:[%s431] sm:$0xf]
    %v433 = vld [vmem:[%s431 + $0x4] sm:$0xf]
    %v434 = vld [vmem:[%s431 + $0x8] sm:$0xf]
    %v435 = vld [vmem:[%s431 + $0xc] sm:$0xf]
    %v436 = vpack.c.bf16 %v423, %v422
    %s437 = scalar_lea.vmem [#allocation2], 64
    %v438 = vld [vmem:[%s437] sm:$0xf]
    %v439 = vld [vmem:[%s437 + $0x4] sm:$0xf]
    %v440 = vld [vmem:[%s437 + $0x8] sm:$0xf]
    %v441 = vld [vmem:[%s437 + $0xc] sm:$0xf]
    %v446 = vunpack.c.l.b16 %v438
    %v447 = vunpack.c.l.b16 %v439
    %v448 = vunpack.c.l.b16 %v440
    %v449 = vunpack.c.l.b16 %v441
    %v450 = vpack.c.b16 %v447, %v446
    %v451 = vpack.c.b16 %v449, %v448
    %v455 = vsel %vm222, %v436, 0
    %457 = vmatprep.subr.bf16.mxu0 0
    %458 = vmatpush1.bf16.msra.mxu0 %v450
    %459 = vmatprep.subr.bf16.mxu0 0
    %460 = vmatpush1.bf16.msra.mxu0 %v451
    %461 = vmatprep.subr.bf16.mxu0 0
    %462 = vmatpush1.bf16.msra.mxu0 0
    %463 = vmatprep.subr.bf16.mxu0 0
    %464 = vmatpush1.bf16.msra.mxu0 0
    %465 = vmatprep.subr.bf16.mxu0 0
    %466 = vmatpush1.bf16.msra.mxu0 0
    %467 = vmatprep.subr.bf16.mxu0 0
    %468 = vmatpush1.bf16.msra.mxu0 0
    %469 = vmatprep.subr.bf16.mxu0 0
    %470 = vmatpush1.bf16.msra.mxu0 0
    %471 = vmatprep.subr.bf16.mxu0 0
    %472 = vmatpush1.bf16.msra.mxu0 0
    %473 = vmatprep.subr.bf16.mxu0 0
    %474 = vmatpush1.bf16.msra.mxu0 0
    %475 = vmatprep.subr.bf16.mxu0 0
    %476 = vmatpush1.bf16.msra.mxu0 0
    %477 = vmatprep.subr.bf16.mxu0 0
    %478 = vmatpush1.bf16.msra.mxu0 0
    %479 = vmatprep.subr.bf16.mxu0 0
    %480 = vmatpush1.bf16.msra.mxu0 0
    %481 = vmatprep.subr.bf16.mxu0 0
    %482 = vmatpush1.bf16.msra.mxu0 0
    %483 = vmatprep.subr.bf16.mxu0 0
    %484 = vmatpush1.bf16.msra.mxu0 0
    %485 = vmatprep.subr.bf16.mxu0 0
    %486 = vmatpush1.bf16.msra.mxu0 0
    %487 = vmatprep.subr.bf16.mxu0 0
    %488 = vmatpush1.bf16.msra.mxu0 0
    %489 = vmatprep.mubr.bf16.mxu0 0
    %490 = vmatmul.mubr.bf16.gmra.mrb[0].mxu0 %v455
    %v491 = vpop.f32.mrb[0].mxu0
    %v492 = vadd.f32 0.0, %v491
    %v493 = vpop.f32.mrb[0].mxu0
    %v494 = vpop.f32.mrb[0].mxu0
    %v495 = vadd.f32 0.0, %v494
    %v496 = vpop.f32.mrb[0].mxu0
    %497 = vdwg.mxu0
    %v502 = vunpack.c.l.b16 %v432
    %v503 = vunpack.c.l.b16 %v433
    %v504 = vunpack.c.l.b16 %v434
    %v505 = vunpack.c.l.b16 %v435
    %v506 = vpack.c.b16 %v503, %v502
    %v507 = vpack.c.b16 %v505, %v504
    %v511 = vsel %vm222, %v430, 0
    %513 = vmatprep.subr.bf16.mxu0 0
    %514 = vmatpush1.bf16.msra.mxu0 %v506
    %515 = vmatprep.subr.bf16.mxu0 0
    %516 = vmatpush1.bf16.msra.mxu0 %v507
    %517 = vmatprep.subr.bf16.mxu0 0
    %518 = vmatpush1.bf16.msra.mxu0 0
    %519 = vmatprep.subr.bf16.mxu0 0
    %520 = vmatpush1.bf16.msra.mxu0 0
    %521 = vmatprep.subr.bf16.mxu0 0
    %522 = vmatpush1.bf16.msra.mxu0 0
    %523 = vmatprep.subr.bf16.mxu0 0
    %524 = vmatpush1.bf16.msra.mxu0 0
    %525 = vmatprep.subr.bf16.mxu0 0
    %526 = vmatpush1.bf16.msra.mxu0 0
    %527 = vmatprep.subr.bf16.mxu0 0
    %528 = vmatpush1.bf16.msra.mxu0 0
    %529 = vmatprep.subr.bf16.mxu0 0
    %530 = vmatpush1.bf16.msra.mxu0 0
    %531 = vmatprep.subr.bf16.mxu0 0
    %532 = vmatpush1.bf16.msra.mxu0 0
    %533 = vmatprep.subr.bf16.mxu0 0
    %534 = vmatpush1.bf16.msra.mxu0 0
    %535 = vmatprep.subr.bf16.mxu0 0
    %536 = vmatpush1.bf16.msra.mxu0 0
    %537 = vmatprep.subr.bf16.mxu0 0
    %538 = vmatpush1.bf16.msra.mxu0 0
    %539 = vmatprep.subr.bf16.mxu0 0
    %540 = vmatpush1.bf16.msra.mxu0 0
    %541 = vmatprep.subr.bf16.mxu0 0
    %542 = vmatpush1.bf16.msra.mxu0 0
    %543 = vmatprep.subr.bf16.mxu0 0
    %544 = vmatpush1.bf16.msra.mxu0 0
    %545 = vmatprep.mubr.bf16.mxu0 0
    %546 = vmatmul.mubr.bf16.gmra.mrb[0].mxu0 %v511
    %v547 = vpop.f32.mrb[0].mxu0
    %v548 = vadd.f32 %v492, %v547
    %v549 = vpop.f32.mrb[0].mxu0
    %v550 = vpop.f32.mrb[0].mxu0
    %v551 = vadd.f32 %v495, %v550
    %v552 = vpop.f32.mrb[0].mxu0
    %553 = vdwg.mxu0
    %v554 = vpack.c.bf16 %v417, %v416
    %s555 = scalar_lea.vmem [#allocation2], 80
    %v556 = vld [vmem:[%s555] sm:$0xf]
    %v557 = vld [vmem:[%s555 + $0x4] sm:$0xf]
    %v558 = vld [vmem:[%s555 + $0x8] sm:$0xf]
    %v559 = vld [vmem:[%s555 + $0xc] sm:$0xf]
    %v564 = vunpack.c.l.b16 %v556
    %v565 = vunpack.c.l.b16 %v557
    %v566 = vunpack.c.l.b16 %v558
    %v567 = vunpack.c.l.b16 %v559
    %v568 = vpack.c.b16 %v565, %v564
    %v569 = vpack.c.b16 %v567, %v566
    %v573 = vsel %vm222, %v554, 0
    %575 = vmatprep.subr.bf16.mxu0 0
    %576 = vmatpush1.bf16.msra.mxu0 %v568
    %577 = vmatprep.subr.bf16.mxu0 0
    %578 = vmatpush1.bf16.msra.mxu0 %v569
    %579 = vmatprep.subr.bf16.mxu0 0
    %580 = vmatpush1.bf16.msra.mxu0 0
    %581 = vmatprep.subr.bf16.mxu0 0
    %582 = vmatpush1.bf16.msra.mxu0 0
    %583 = vmatprep.subr.bf16.mxu0 0
    %584 = vmatpush1.bf16.msra.mxu0 0
    %585 = vmatprep.subr.bf16.mxu0 0
    %586 = vmatpush1.bf16.msra.mxu0 0
    %587 = vmatprep.subr.bf16.mxu0 0
    %588 = vmatpush1.bf16.msra.mxu0 0
    %589 = vmatprep.subr.bf16.mxu0 0
    %590 = vmatpush1.bf16.msra.mxu0 0
    %591 = vmatprep.subr.bf16.mxu0 0
    %592 = vmatpush1.bf16.msra.mxu0 0
    %593 = vmatprep.subr.bf16.mxu0 0
    %594 = vmatpush1.bf16.msra.mxu0 0
    %595 = vmatprep.subr.bf16.mxu0 0
    %596 = vmatpush1.bf16.msra.mxu0 0
    %597 = vmatprep.subr.bf16.mxu0 0
    %598 = vmatpush1.bf16.msra.mxu0 0
    %599 = vmatprep.subr.bf16.mxu0 0
    %600 = vmatpush1.bf16.msra.mxu0 0
    %601 = vmatprep.subr.bf16.mxu0 0
    %602 = vmatpush1.bf16.msra.mxu0 0
    %603 = vmatprep.subr.bf16.mxu0 0
    %604 = vmatpush1.bf16.msra.mxu0 0
    %605 = vmatprep.subr.bf16.mxu0 0
    %606 = vmatpush1.bf16.msra.mxu0 0
    %607 = vmatprep.mubr.bf16.mxu0 0
    %608 = vmatmul.mubr.bf16.gmra.mrb[0].mxu0 %v573
    %v609 = vpop.f32.mrb[0].mxu0
    %v610 = vadd.f32 0.0, %v609
    %v611 = vpop.f32.mrb[0].mxu0
    %v612 = vpop.f32.mrb[0].mxu0
    %v613 = vadd.f32 0.0, %v612
    %v614 = vpop.f32.mrb[0].mxu0
    %615 = vdwg.mxu0
    %v616 = vadd.f32 %v548, %v610
    %v617 = vadd.f32 %v551, %v613
    %s618 = scalar_lea.vmem %s3, 1
    %v619 = vld [vmem:[%s618] sm:$0x1]
    %v621 = vlaneseq
    %v622 = vshrl.u32 %v621, 7
    %v623 = vsub.s32 0, %v622
    %v624 = vrot.slane %v619, %v623
    %v626 = vadd.f32 %v616, %v624
    %v627 = vadd.f32 %v617, %v624
    %v628 = vxor.u32 %v626, 2147483648
    %v629 = vxor.u32 %v627, 2147483648
    %v630 = vmul.f32 %v628, 1.442695
    %v631 = vpow.pop %v630
    %v632 = vmul.f32 %v629, 1.442695
    %v633 = vpow.pop %v632
    %v634 = vadd.f32 %v631, 1.0
    %v635 = vadd.f32 %v633, 1.0
    %v636 = vrcp.pop %v634
    %v637 = vmul.f32 1.0, %v636
    %v638 = vrcp.pop %v635
    %v639 = vmul.f32 1.0, %v638
    %642 = vrot.lane.b32.xlu0 %v637, 96
    %v643 = vpop.permute.xlu0 %642
    %644 = vrot.lane.b32.xlu0 %v639, 96
    %v645 = vpop.permute.xlu0 %644
    %v648 = vmul.f32 %v626, %v643
    %v649 = vmul.f32 %v627, %v645
    %v650 = vrot.slane %v648, 7
    %v651 = vrot.slane %v649, 7
    %v652 = vsel %vm187, %v650, %v651
    %v653 = vsel %vm187, %v651, %v650
    %v654 = vsel %vm181, %v653, 0.0
    %v655 = vsel %vm182, %v652, 0.0
    %v656 = vrot.slane %v648, 6
    %v657 = vrot.slane %v649, 6
    %v658 = vsel %vm194, %v656, %v657
    %v659 = vsel %vm194, %v657, %v656
    %v660 = vsel %vm183, %v659, 0.0
    %v661 = vsel %vm184, %v658, 0.0
    %v662 = vpack.c.bf16 %v661, %v660
    %s663 = scalar_lea.vmem [#allocation2], 96
    %v664 = vld [vmem:[%s663] sm:$0xf]
    %v665 = vld [vmem:[%s663 + $0x4] sm:$0xf]
    %v666 = vld [vmem:[%s663 + $0x8] sm:$0xf]
    %v667 = vld [vmem:[%s663 + $0xc] sm:$0xf]
    %v668 = vpack.c.bf16 %v655, %v654
    %s669 = scalar_lea.vmem [#allocation2], 112
    %v670 = vld [vmem:[%s669] sm:$0xf]
    %v671 = vld [vmem:[%s669 + $0x4] sm:$0xf]
    %v672 = vld [vmem:[%s669 + $0x8] sm:$0xf]
    %v673 = vld [vmem:[%s669 + $0xc] sm:$0xf]
    %v678 = vunpack.c.l.b16 %v670
    %v679 = vunpack.c.l.b16 %v671
    %v680 = vunpack.c.l.b16 %v672
    %v681 = vunpack.c.l.b16 %v673
    %v682 = vpack.c.b16 %v679, %v678
    %v683 = vpack.c.b16 %v681, %v680
    %v687 = vsel %vm222, %v668, 0
    %689 = vmatprep.subr.bf16.mxu0 0
    %690 = vmatpush1.bf16.msra.mxu0 %v682
    %691 = vmatprep.subr.bf16.mxu0 0
    %692 = vmatpush1.bf16.msra.mxu0 %v683
    %693 = vmatprep.subr.bf16.mxu0 0
    %694 = vmatpush1.bf16.msra.mxu0 0
    %695 = vmatprep.subr.bf16.mxu0 0
    %696 = vmatpush1.bf16.msra.mxu0 0
    %697 = vmatprep.subr.bf16.mxu0 0
    %698 = vmatpush1.bf16.msra.mxu0 0
    %699 = vmatprep.subr.bf16.mxu0 0
    %700 = vmatpush1.bf16.msra.mxu0 0
    %701 = vmatprep.subr.bf16.mxu0 0
    %702 = vmatpush1.bf16.msra.mxu0 0
    %703 = vmatprep.subr.bf16.mxu0 0
    %704 = vmatpush1.bf16.msra.mxu0 0
    %705 = vmatprep.subr.bf16.mxu0 0
    %706 = vmatpush1.bf16.msra.mxu0 0
    %707 = vmatprep.subr.bf16.mxu0 0
    %708 = vmatpush1.bf16.msra.mxu0 0
    %709 = vmatprep.subr.bf16.mxu0 0
    %710 = vmatpush1.bf16.msra.mxu0 0
    %711 = vmatprep.subr.bf16.mxu0 0
    %712 = vmatpush1.bf16.msra.mxu0 0
    %713 = vmatprep.subr.bf16.mxu0 0
    %714 = vmatpush1.bf16.msra.mxu0 0
    %715 = vmatprep.subr.bf16.mxu0 0
    %716 = vmatpush1.bf16.msra.mxu0 0
    %717 = vmatprep.subr.bf16.mxu0 0
    %718 = vmatpush1.bf16.msra.mxu0 0
    %719 = vmatprep.subr.bf16.mxu0 0
    %720 = vmatpush1.bf16.msra.mxu0 0
    %721 = vmatprep.mubr.bf16.mxu0 0
    %722 = vmatmul.mubr.bf16.gmra.mrb[0].mxu0 %v687
    %v723 = vpop.f32.mrb[0].mxu0
    %v724 = vadd.f32 0.0, %v723
    %v725 = vpop.f32.mrb[0].mxu0
    %v726 = vpop.f32.mrb[0].mxu0
    %v727 = vadd.f32 0.0, %v726
    %v728 = vpop.f32.mrb[0].mxu0
    %729 = vdwg.mxu0
    %v734 = vunpack.c.l.b16 %v664
    %v735 = vunpack.c.l.b16 %v665
    %v736 = vunpack.c.l.b16 %v666
    %v737 = vunpack.c.l.b16 %v667
    %v738 = vpack.c.b16 %v735, %v734
    %v739 = vpack.c.b16 %v737, %v736
    %v743 = vsel %vm222, %v662, 0
    %745 = vmatprep.subr.bf16.mxu0 0
    %746 = vmatpush1.bf16.msra.mxu0 %v738
    %747 = vmatprep.subr.bf16.mxu0 0
    %748 = vmatpush1.bf16.msra.mxu0 %v739
    %749 = vmatprep.subr.bf16.mxu0 0
    %750 = vmatpush1.bf16.msra.mxu0 0
    %751 = vmatprep.subr.bf16.mxu0 0
    %752 = vmatpush1.bf16.msra.mxu0 0
    %753 = vmatprep.subr.bf16.mxu0 0
    %754 = vmatpush1.bf16.msra.mxu0 0
    %755 = vmatprep.subr.bf16.mxu0 0
    %756 = vmatpush1.bf16.msra.mxu0 0
    %757 = vmatprep.subr.bf16.mxu0 0
    %758 = vmatpush1.bf16.msra.mxu0 0
    %759 = vmatprep.subr.bf16.mxu0 0
    %760 = vmatpush1.bf16.msra.mxu0 0
    %761 = vmatprep.subr.bf16.mxu0 0
    %762 = vmatpush1.bf16.msra.mxu0 0
    %763 = vmatprep.subr.bf16.mxu0 0
    %764 = vmatpush1.bf16.msra.mxu0 0
    %765 = vmatprep.subr.bf16.mxu0 0
    %766 = vmatpush1.bf16.msra.mxu0 0
    %767 = vmatprep.subr.bf16.mxu0 0
    %768 = vmatpush1.bf16.msra.mxu0 0
    %769 = vmatprep.subr.bf16.mxu0 0
    %770 = vmatpush1.bf16.msra.mxu0 0
    %771 = vmatprep.subr.bf16.mxu0 0
    %772 = vmatpush1.bf16.msra.mxu0 0
    %773 = vmatprep.subr.bf16.mxu0 0
    %774 = vmatpush1.bf16.msra.mxu0 0
    %775 = vmatprep.subr.bf16.mxu0 0
    %776 = vmatpush1.bf16.msra.mxu0 0
    %777 = vmatprep.mubr.bf16.mxu0 0
    %778 = vmatmul.mubr.bf16.gmra.mrb[0].mxu0 %v743
    %v779 = vpop.f32.mrb[0].mxu0
    %v780 = vadd.f32 %v724, %v779
    %v781 = vpop.f32.mrb[0].mxu0
    %v782 = vpop.f32.mrb[0].mxu0
    %v783 = vadd.f32 %v727, %v782
    %v784 = vpop.f32.mrb[0].mxu0
    %785 = vdwg.mxu0
    %v786 = vpack.c.bf16 %v649, %v648
    %s787 = scalar_lea.vmem [#allocation2], 128
    %v788 = vld [vmem:[%s787] sm:$0xf]
    %v789 = vld [vmem:[%s787 + $0x4] sm:$0xf]
    %v790 = vld [vmem:[%s787 + $0x8] sm:$0xf]
    %v791 = vld [vmem:[%s787 + $0xc] sm:$0xf]
    %v796 = vunpack.c.l.b16 %v788
    %v797 = vunpack.c.l.b16 %v789
    %v798 = vunpack.c.l.b16 %v790
    %v799 = vunpack.c.l.b16 %v791
    %v800 = vpack.c.b16 %v797, %v796
    %v801 = vpack.c.b16 %v799, %v798
    %v805 = vsel %vm222, %v786, 0
    %807 = vmatprep.subr.bf16.mxu0 0
    %808 = vmatpush1.bf16.msra.mxu0 %v800
    %809 = vmatprep.subr.bf16.mxu0 0
    %810 = vmatpush1.bf16.msra.mxu0 %v801
    %811 = vmatprep.subr.bf16.mxu0 0
    %812 = vmatpush1.bf16.msra.mxu0 0
    %813 = vmatprep.subr.bf16.mxu0 0
    %814 = vmatpush1.bf16.msra.mxu0 0
    %815 = vmatprep.subr.bf16.mxu0 0
    %816 = vmatpush1.bf16.msra.mxu0 0
    %817 = vmatprep.subr.bf16.mxu0 0
    %818 = vmatpush1.bf16.msra.mxu0 0
    %819 = vmatprep.subr.bf16.mxu0 0
    %820 = vmatpush1.bf16.msra.mxu0 0
    %821 = vmatprep.subr.bf16.mxu0 0
    %822 = vmatpush1.bf16.msra.mxu0 0
    %823 = vmatprep.subr.bf16.mxu0 0
    %824 = vmatpush1.bf16.msra.mxu0 0
    %825 = vmatprep.subr.bf16.mxu0 0
    %826 = vmatpush1.bf16.msra.mxu0 0
    %827 = vmatprep.subr.bf16.mxu0 0
    %828 = vmatpush1.bf16.msra.mxu0 0
    %829 = vmatprep.subr.bf16.mxu0 0
    %830 = vmatpush1.bf16.msra.mxu0 0
    %831 = vmatprep.subr.bf16.mxu0 0
    %832 = vmatpush1.bf16.msra.mxu0 0
    %833 = vmatprep.subr.bf16.mxu0 0
    %834 = vmatpush1.bf16.msra.mxu0 0
    %835 = vmatprep.subr.bf16.mxu0 0
    %836 = vmatpush1.bf16.msra.mxu0 0
    %837 = vmatprep.subr.bf16.mxu0 0
    %838 = vmatpush1.bf16.msra.mxu0 0
    %839 = vmatprep.mubr.bf16.mxu0 0
    %840 = vmatmul.mubr.bf16.gmra.mrb[0].mxu0 %v805
    %v841 = vpop.f32.mrb[0].mxu0
    %v842 = vadd.f32 0.0, %v841
    %v843 = vpop.f32.mrb[0].mxu0
    %v844 = vpop.f32.mrb[0].mxu0
    %v845 = vadd.f32 0.0, %v844
    %v846 = vpop.f32.mrb[0].mxu0
    %847 = vdwg.mxu0
    %v848 = vadd.f32 %v780, %v842
    %v849 = vadd.f32 %v783, %v845
    %s850 = scalar_lea.vmem %s3, 2
    %v851 = vld [vmem:[%s850] sm:$0x1]
    %v853 = vlaneseq
    %v854 = vshrl.u32 %v853, 7
    %v855 = vsub.s32 0, %v854
    %v856 = vrot.slane %v851, %v855
    %v858 = vadd.f32 %v848, %v856
    %v859 = vadd.f32 %v849, %v856
    %v860 = vxor.u32 %v858, 2147483648
    %v861 = vxor.u32 %v859, 2147483648
    %v862 = vmul.f32 %v860, 1.442695
    %v863 = vpow.pop %v862
    %v864 = vmul.f32 %v861, 1.442695
    %v865 = vpow.pop %v864
    %v866 = vadd.f32 %v863, 1.0
    %v867 = vadd.f32 %v865, 1.0
    %v868 = vrcp.pop %v866
    %v869 = vmul.f32 1.0, %v868
    %v870 = vrcp.pop %v867
    %v871 = vmul.f32 1.0, %v870
    %874 = vrot.lane.b32.xlu0 %v869, 96
    %v875 = vpop.permute.xlu0 %874
    %876 = vrot.lane.b32.xlu0 %v871, 96
    %v877 = vpop.permute.xlu0 %876
    %v880 = vmul.f32 %v858, %v875
    %v881 = vmul.f32 %v859, %v877
    %v882 = vrot.slane %v880, 7
    %v883 = vrot.slane %v881, 7
    %v884 = vsel %vm187, %v882, %v883
    %v885 = vsel %vm187, %v883, %v882
    %v886 = vsel %vm181, %v885, 0.0
    %v887 = vsel %vm182, %v884, 0.0
    %v888 = vrot.slane %v880, 6
    %v889 = vrot.slane %v881, 6
    %v890 = vsel %vm194, %v888, %v889
    %v891 = vsel %vm194, %v889, %v888
    %v892 = vsel %vm183, %v891, 0.0
    %v893 = vsel %vm184, %v890, 0.0
    %v894 = vpack.c.bf16 %v893, %v892
    %s895 = scalar_lea.vmem [#allocation2], 144
    %v896 = vld [vmem:[%s895] sm:$0xf]
    %v897 = vld [vmem:[%s895 + $0x4] sm:$0xf]
    %v898 = vld [vmem:[%s895 + $0x8] sm:$0xf]
    %v899 = vld [vmem:[%s895 + $0xc] sm:$0xf]
    %v900 = vpack.c.bf16 %v887, %v886
    %s901 = scalar_lea.vmem [#allocation2], 160
    %v902 = vld [vmem:[%s901] sm:$0xf]
    %v903 = vld [vmem:[%s901 + $0x4] sm:$0xf]
    %v904 = vld [vmem:[%s901 + $0x8] sm:$0xf]
    %v905 = vld [vmem:[%s901 + $0xc] sm:$0xf]
    %v910 = vunpack.c.l.b16 %v902
    %v911 = vunpack.c.l.b16 %v903
    %v912 = vunpack.c.l.b16 %v904
    %v913 = vunpack.c.l.b16 %v905
    %v914 = vpack.c.b16 %v911, %v910
    %v915 = vpack.c.b16 %v913, %v912
    %v919 = vsel %vm222, %v900, 0
    %921 = vmatprep.subr.bf16.mxu0 0
    %922 = vmatpush1.bf16.msra.mxu0 %v914
    %923 = vmatprep.subr.bf16.mxu0 0
    %924 = vmatpush1.bf16.msra.mxu0 %v915
    %925 = vmatprep.subr.bf16.mxu0 0
    %926 = vmatpush1.bf16.msra.mxu0 0
    %927 = vmatprep.subr.bf16.mxu0 0
    %928 = vmatpush1.bf16.msra.mxu0 0
    %929 = vmatprep.subr.bf16.mxu0 0
    %930 = vmatpush1.bf16.msra.mxu0 0
    %931 = vmatprep.subr.bf16.mxu0 0
    %932 = vmatpush1.bf16.msra.mxu0 0
    %933 = vmatprep.subr.bf16.mxu0 0
    %934 = vmatpush1.bf16.msra.mxu0 0
    %935 = vmatprep.subr.bf16.mxu0 0
    %936 = vmatpush1.bf16.msra.mxu0 0
    %937 = vmatprep.subr.bf16.mxu0 0
    %938 = vmatpush1.bf16.msra.mxu0 0
    %939 = vmatprep.subr.bf16.mxu0 0
    %940 = vmatpush1.bf16.msra.mxu0 0
    %941 = vmatprep.subr.bf16.mxu0 0
    %942 = vmatpush1.bf16.msra.mxu0 0
    %943 = vmatprep.subr.bf16.mxu0 0
    %944 = vmatpush1.bf16.msra.mxu0 0
    %945 = vmatprep.subr.bf16.mxu0 0
    %946 = vmatpush1.bf16.msra.mxu0 0
    %947 = vmatprep.subr.bf16.mxu0 0
    %948 = vmatpush1.bf16.msra.mxu0 0
    %949 = vmatprep.subr.bf16.mxu0 0
    %950 = vmatpush1.bf16.msra.mxu0 0
    %951 = vmatprep.subr.bf16.mxu0 0
    %952 = vmatpush1.bf16.msra.mxu0 0
    %953 = vmatprep.mubr.bf16.mxu0 0
    %954 = vmatmul.mubr.bf16.gmra.mrb[0].mxu0 %v919
    %v955 = vpop.f32.mrb[0].mxu0
    %v956 = vadd.f32 0.0, %v955
    %v957 = vpop.f32.mrb[0].mxu0
    %v958 = vpop.f32.mrb[0].mxu0
    %v959 = vadd.f32 0.0, %v958
    %v960 = vpop.f32.mrb[0].mxu0
    %961 = vdwg.mxu0
    %v966 = vunpack.c.l.b16 %v896
    %v967 = vunpack.c.l.b16 %v897
    %v968 = vunpack.c.l.b16 %v898
    %v969 = vunpack.c.l.b16 %v899
    %v970 = vpack.c.b16 %v967, %v966
    %v971 = vpack.c.b16 %v969, %v968
    %v975 = vsel %vm222, %v894, 0
    %977 = vmatprep.subr.bf16.mxu0 0
    %978 = vmatpush1.bf16.msra.mxu0 %v970
    %979 = vmatprep.subr.bf16.mxu0 0
    %980 = vmatpush1.bf16.msra.mxu0 %v971
    %981 = vmatprep.subr.bf16.mxu0 0
    %982 = vmatpush1.bf16.msra.mxu0 0
    %983 = vmatprep.subr.bf16.mxu0 0
    %984 = vmatpush1.bf16.msra.mxu0 0
    %985 = vmatprep.subr.bf16.mxu0 0
    %986 = vmatpush1.bf16.msra.mxu0 0
    %987 = vmatprep.subr.bf16.mxu0 0
    %988 = vmatpush1.bf16.msra.mxu0 0
    %989 = vmatprep.subr.bf16.mxu0 0
    %990 = vmatpush1.bf16.msra.mxu0 0
    %991 = vmatprep.subr.bf16.mxu0 0
    %992 = vmatpush1.bf16.msra.mxu0 0
    %993 = vmatprep.subr.bf16.mxu0 0
    %994 = vmatpush1.bf16.msra.mxu0 0
    %995 = vmatprep.subr.bf16.mxu0 0
    %996 = vmatpush1.bf16.msra.mxu0 0
    %997 = vmatprep.subr.bf16.mxu0 0
    %998 = vmatpush1.bf16.msra.mxu0 0
    %999 = vmatprep.subr.bf16.mxu0 0
    %1000 = vmatpush1.bf16.msra.mxu0 0
    %1001 = vmatprep.subr.bf16.mxu0 0
    %1002 = vmatpush1.bf16.msra.mxu0 0
    %1003 = vmatprep.subr.bf16.mxu0 0
    %1004 = vmatpush1.bf16.msra.mxu0 0
    %1005 = vmatprep.subr.bf16.mxu0 0
    %1006 = vmatpush1.bf16.msra.mxu0 0
    %1007 = vmatprep.subr.bf16.mxu0 0
    %1008 = vmatpush1.bf16.msra.mxu0 0
    %1009 = vmatprep.mubr.bf16.mxu0 0
    %1010 = vmatmul.mubr.bf16.gmra.mrb[0].mxu0 %v975
    %v1011 = vpop.f32.mrb[0].mxu0
    %v1012 = vadd.f32 %v956, %v1011
    %v1013 = vpop.f32.mrb[0].mxu0
    %v1014 = vpop.f32.mrb[0].mxu0
    %v1015 = vadd.f32 %v959, %v1014
    %v1016 = vpop.f32.mrb[0].mxu0
    %1017 = vdwg.mxu0
    %v1018 = vpack.c.bf16 %v881, %v880
    %s1019 = scalar_lea.vmem [#allocation2], 176
    %v1020 = vld [vmem:[%s1019] sm:$0xf]
    %v1021 = vld [vmem:[%s1019 + $0x4] sm:$0xf]
    %v1022 = vld [vmem:[%s1019 + $0x8] sm:$0xf]
    %v1023 = vld [vmem:[%s1019 + $0xc] sm:$0xf]
    %v1028 = vunpack.c.l.b16 %v1020
    %v1029 = vunpack.c.l.b16 %v1021
    %v1030 = vunpack.c.l.b16 %v1022
    %v1031 = vunpack.c.l.b16 %v1023
    %v1032 = vpack.c.b16 %v1029, %v1028
    %v1033 = vpack.c.b16 %v1031, %v1030
    %v1037 = vsel %vm222, %v1018, 0
    %1039 = vmatprep.subr.bf16.mxu0 0
    %1040 = vmatpush1.bf16.msra.mxu0 %v1032
    %1041 = vmatprep.subr.bf16.mxu0 0
    %1042 = vmatpush1.bf16.msra.mxu0 %v1033
    %1043 = vmatprep.subr.bf16.mxu0 0
    %1044 = vmatpush1.bf16.msra.mxu0 0
    %1045 = vmatprep.subr.bf16.mxu0 0
    %1046 = vmatpush1.bf16.msra.mxu0 0
    %1047 = vmatprep.subr.bf16.mxu0 0
    %1048 = vmatpush1.bf16.msra.mxu0 0
    %1049 = vmatprep.subr.bf16.mxu0 0
    %1050 = vmatpush1.bf16.msra.mxu0 0
    %1051 = vmatprep.subr.bf16.mxu0 0
    %1052 = vmatpush1.bf16.msra.mxu0 0
    %1053 = vmatprep.subr.bf16.mxu0 0
    %1054 = vmatpush1.bf16.msra.mxu0 0
    %1055 = vmatprep.subr.bf16.mxu0 0
    %1056 = vmatpush1.bf16.msra.mxu0 0
    %1057 = vmatprep.subr.bf16.mxu0 0
    %1058 = vmatpush1.bf16.msra.mxu0 0
    %1059 = vmatprep.subr.bf16.mxu0 0
    %1060 = vmatpush1.bf16.msra.mxu0 0
    %1061 = vmatprep.subr.bf16.mxu0 0
    %1062 = vmatpush1.bf16.msra.mxu0 0
    %1063 = vmatprep.subr.bf16.mxu0 0
    %1064 = vmatpush1.bf16.msra.mxu0 0
    %1065 = vmatprep.subr.bf16.mxu0 0
    %1066 = vmatpush1.bf16.msra.mxu0 0
    %1067 = vmatprep.subr.bf16.mxu0 0
    %1068 = vmatpush1.bf16.msra.mxu0 0
    %1069 = vmatprep.subr.bf16.mxu0 0
    %1070 = vmatpush1.bf16.msra.mxu0 0
    %1071 = vmatprep.mubr.bf16.mxu0 0
    %1072 = vmatmul.mubr.bf16.gmra.mrb[0].mxu0 %v1037
    %v1073 = vpop.f32.mrb[0].mxu0
    %v1074 = vadd.f32 0.0, %v1073
    %v1075 = vpop.f32.mrb[0].mxu0
    %v1076 = vpop.f32.mrb[0].mxu0
    %v1077 = vadd.f32 0.0, %v1076
    %v1078 = vpop.f32.mrb[0].mxu0
    %1079 = vdwg.mxu0
    %v1080 = vadd.f32 %v1012, %v1074
    %v1081 = vadd.f32 %v1015, %v1077
    %s1082 = scalar_lea.vmem %s3, 3
    %v1083 = vld [vmem:[%s1082] sm:$0x1]
    %v1085 = vlaneseq
    %v1086 = vshrl.u32 %v1085, 7
    %v1087 = vsub.s32 0, %v1086
    %v1088 = vrot.slane %v1083, %v1087
    %v1090 = vadd.f32 %v1080, %v1088
    %v1091 = vadd.f32 %v1081, %v1088
    %v1092 = vxor.u32 %v1090, 2147483648
    %v1093 = vxor.u32 %v1091, 2147483648
    %v1094 = vmul.f32 %v1092, 1.442695
    %v1095 = vpow.pop %v1094
    %v1096 = vmul.f32 %v1093, 1.442695
    %v1097 = vpow.pop %v1096
    %v1098 = vadd.f32 %v1095, 1.0
    %v1099 = vadd.f32 %v1097, 1.0
    %v1100 = vrcp.pop %v1098
    %v1101 = vmul.f32 1.0, %v1100
    %v1102 = vrcp.pop %v1099
    %v1103 = vmul.f32 1.0, %v1102
    %1106 = vrot.lane.b32.xlu0 %v1101, 96
    %v1107 = vpop.permute.xlu0 %1106
    %1108 = vrot.lane.b32.xlu0 %v1103, 96
    %v1109 = vpop.permute.xlu0 %1108
    %v1112 = vmul.f32 %v1090, %v1107
    %v1113 = vmul.f32 %v1091, %v1109
    %v1114 = vrot.slane %v1112, 7
    %v1115 = vrot.slane %v1113, 7
    %v1116 = vsel %vm187, %v1114, %v1115
    %v1117 = vsel %vm187, %v1115, %v1114
    %v1118 = vsel %vm181, %v1117, 0.0
    %v1119 = vsel %vm182, %v1116, 0.0
    %v1120 = vrot.slane %v1112, 6
    %v1121 = vrot.slane %v1113, 6
    %v1122 = vsel %vm194, %v1120, %v1121
    %v1123 = vsel %vm194, %v1121, %v1120
    %v1124 = vsel %vm183, %v1123, 0.0
    %v1125 = vsel %vm184, %v1122, 0.0
    %v1126 = vpack.c.bf16 %v1125, %v1124
    %s1127 = scalar_lea.vmem [#allocation2], 192
    %v1128 = vld [vmem:[%s1127] sm:$0xf]
    %v1129 = vld [vmem:[%s1127 + $0x4] sm:$0xf]
    %v1130 = vld [vmem:[%s1127 + $0x8] sm:$0xf]
    %v1131 = vld [vmem:[%s1127 + $0xc] sm:$0xf]
    %v1132 = vpack.c.bf16 %v1119, %v1118
    %s1133 = scalar_lea.vmem [#allocation2], 208
    %v1134 = vld [vmem:[%s1133] sm:$0xf]
    %v1135 = vld [vmem:[%s1133 + $0x4] sm:$0xf]
    %v1136 = vld [vmem:[%s1133 + $0x8] sm:$0xf]
    %v1137 = vld [vmem:[%s1133 + $0xc] sm:$0xf]
    %v1142 = vunpack.c.l.b16 %v1134
    %v1143 = vunpack.c.l.b16 %v1135
    %v1144 = vunpack.c.l.b16 %v1136
    %v1145 = vunpack.c.l.b16 %v1137
    %v1146 = vpack.c.b16 %v1143, %v1142
    %v1147 = vpack.c.b16 %v1145, %v1144
    %v1151 = vsel %vm222, %v1132, 0
    %1153 = vmatprep.subr.bf16.mxu0 0
    %1154 = vmatpush1.bf16.msra.mxu0 %v1146
    %1155 = vmatprep.subr.bf16.mxu0 0
    %1156 = vmatpush1.bf16.msra.mxu0 %v1147
    %1157 = vmatprep.subr.bf16.mxu0 0
    %1158 = vmatpush1.bf16.msra.mxu0 0
    %1159 = vmatprep.subr.bf16.mxu0 0
    %1160 = vmatpush1.bf16.msra.mxu0 0
    %1161 = vmatprep.subr.bf16.mxu0 0
    %1162 = vmatpush1.bf16.msra.mxu0 0
    %1163 = vmatprep.subr.bf16.mxu0 0
    %1164 = vmatpush1.bf16.msra.mxu0 0
    %1165 = vmatprep.subr.bf16.mxu0 0
    %1166 = vmatpush1.bf16.msra.mxu0 0
    %1167 = vmatprep.subr.bf16.mxu0 0
    %1168 = vmatpush1.bf16.msra.mxu0 0
    %1169 = vmatprep.subr.bf16.mxu0 0
    %1170 = vmatpush1.bf16.msra.mxu0 0
    %1171 = vmatprep.subr.bf16.mxu0 0
    %1172 = vmatpush1.bf16.msra.mxu0 0
    %1173 = vmatprep.subr.bf16.mxu0 0
    %1174 = vmatpush1.bf16.msra.mxu0 0
    %1175 = vmatprep.subr.bf16.mxu0 0
    %1176 = vmatpush1.bf16.msra.mxu0 0
    %1177 = vmatprep.subr.bf16.mxu0 0
    %1178 = vmatpush1.bf16.msra.mxu0 0
    %1179 = vmatprep.subr.bf16.mxu0 0
    %1180 = vmatpush1.bf16.msra.mxu0 0
    %1181 = vmatprep.subr.bf16.mxu0 0
    %1182 = vmatpush1.bf16.msra.mxu0 0
    %1183 = vmatprep.subr.bf16.mxu0 0
    %1184 = vmatpush1.bf16.msra.mxu0 0
    %1185 = vmatprep.mubr.bf16.mxu0 0
    %1186 = vmatmul.mubr.bf16.gmra.mrb[0].mxu0 %v1151
    %v1187 = vpop.f32.mrb[0].mxu0
    %v1188 = vadd.f32 0.0, %v1187
    %v1189 = vpop.f32.mrb[0].mxu0
    %v1190 = vpop.f32.mrb[0].mxu0
    %v1191 = vadd.f32 0.0, %v1190
    %v1192 = vpop.f32.mrb[0].mxu0
    %1193 = vdwg.mxu0
    %v1198 = vunpack.c.l.b16 %v1128
    %v1199 = vunpack.c.l.b16 %v1129
    %v1200 = vunpack.c.l.b16 %v1130
    %v1201 = vunpack.c.l.b16 %v1131
    %v1202 = vpack.c.b16 %v1199, %v1198
    %v1203 = vpack.c.b16 %v1201, %v1200
    %v1207 = vsel %vm222, %v1126, 0
    %1209 = vmatprep.subr.bf16.mxu0 0
    %1210 = vmatpush1.bf16.msra.mxu0 %v1202
    %1211 = vmatprep.subr.bf16.mxu0 0
    %1212 = vmatpush1.bf16.msra.mxu0 %v1203
    %1213 = vmatprep.subr.bf16.mxu0 0
    %1214 = vmatpush1.bf16.msra.mxu0 0
    %1215 = vmatprep.subr.bf16.mxu0 0
    %1216 = vmatpush1.bf16.msra.mxu0 0
    %1217 = vmatprep.subr.bf16.mxu0 0
    %1218 = vmatpush1.bf16.msra.mxu0 0
    %1219 = vmatprep.subr.bf16.mxu0 0
    %1220 = vmatpush1.bf16.msra.mxu0 0
    %1221 = vmatprep.subr.bf16.mxu0 0
    %1222 = vmatpush1.bf16.msra.mxu0 0
    %1223 = vmatprep.subr.bf16.mxu0 0
    %1224 = vmatpush1.bf16.msra.mxu0 0
    %1225 = vmatprep.subr.bf16.mxu0 0
    %1226 = vmatpush1.bf16.msra.mxu0 0
    %1227 = vmatprep.subr.bf16.mxu0 0
    %1228 = vmatpush1.bf16.msra.mxu0 0
    %1229 = vmatprep.subr.bf16.mxu0 0
    %1230 = vmatpush1.bf16.msra.mxu0 0
    %1231 = vmatprep.subr.bf16.mxu0 0
    %1232 = vmatpush1.bf16.msra.mxu0 0
    %1233 = vmatprep.subr.bf16.mxu0 0
    %1234 = vmatpush1.bf16.msra.mxu0 0
    %1235 = vmatprep.subr.bf16.mxu0 0
    %1236 = vmatpush1.bf16.msra.mxu0 0
    %1237 = vmatprep.subr.bf16.mxu0 0
    %1238 = vmatpush1.bf16.msra.mxu0 0
    %1239 = vmatprep.subr.bf16.mxu0 0
    %1240 = vmatpush1.bf16.msra.mxu0 0
    %1241 = vmatprep.mubr.bf16.mxu0 0
    %1242 = vmatmul.mubr.bf16.gmra.mrb[0].mxu0 %v1207
    %v1243 = vpop.f32.mrb[0].mxu0
    %v1244 = vadd.f32 %v1188, %v1243
    %v1245 = vpop.f32.mrb[0].mxu0
    %v1246 = vpop.f32.mrb[0].mxu0
    %v1247 = vadd.f32 %v1191, %v1246
    %v1248 = vpop.f32.mrb[0].mxu0
    %1249 = vdwg.mxu0
    %v1250 = vpack.c.bf16 %v1113, %v1112
    %s1251 = scalar_lea.vmem [#allocation2], 224
    %v1252 = vld [vmem:[%s1251] sm:$0xf]
    %v1253 = vld [vmem:[%s1251 + $0x4] sm:$0xf]
    %v1254 = vld [vmem:[%s1251 + $0x8] sm:$0xf]
    %v1255 = vld [vmem:[%s1251 + $0xc] sm:$0xf]
    %v1260 = vunpack.c.l.b16 %v1252
    %v1261 = vunpack.c.l.b16 %v1253
    %v1262 = vunpack.c.l.b16 %v1254
    %v1263 = vunpack.c.l.b16 %v1255
    %v1264 = vpack.c.b16 %v1261, %v1260
    %v1265 = vpack.c.b16 %v1263, %v1262
    %v1269 = vsel %vm222, %v1250, 0
    %1271 = vmatprep.subr.bf16.mxu0 0
    %1272 = vmatpush1.bf16.msra.mxu0 %v1264
    %1273 = vmatprep.subr.bf16.mxu0 0
    %1274 = vmatpush1.bf16.msra.mxu0 %v1265
    %1275 = vmatprep.subr.bf16.mxu0 0
    %1276 = vmatpush1.bf16.msra.mxu0 0
    %1277 = vmatprep.subr.bf16.mxu0 0
    %1278 = vmatpush1.bf16.msra.mxu0 0
    %1279 = vmatprep.subr.bf16.mxu0 0
    %1280 = vmatpush1.bf16.msra.mxu0 0
    %1281 = vmatprep.subr.bf16.mxu0 0
    %1282 = vmatpush1.bf16.msra.mxu0 0
    %1283 = vmatprep.subr.bf16.mxu0 0
    %1284 = vmatpush1.bf16.msra.mxu0 0
    %1285 = vmatprep.subr.bf16.mxu0 0
    %1286 = vmatpush1.bf16.msra.mxu0 0
    %1287 = vmatprep.subr.bf16.mxu0 0
    %1288 = vmatpush1.bf16.msra.mxu0 0
    %1289 = vmatprep.subr.bf16.mxu0 0
    %1290 = vmatpush1.bf16.msra.mxu0 0
    %1291 = vmatprep.subr.bf16.mxu0 0
    %1292 = vmatpush1.bf16.msra.mxu0 0
    %1293 = vmatprep.subr.bf16.mxu0 0
    %1294 = vmatpush1.bf16.msra.mxu0 0
    %1295 = vmatprep.subr.bf16.mxu0 0
    %1296 = vmatpush1.bf16.msra.mxu0 0
    %1297 = vmatprep.subr.bf16.mxu0 0
    %1298 = vmatpush1.bf16.msra.mxu0 0
    %1299 = vmatprep.subr.bf16.mxu0 0
    %1300 = vmatpush1.bf16.msra.mxu0 0
    %1301 = vmatprep.subr.bf16.mxu0 0
    %1302 = vmatpush1.bf16.msra.mxu0 0
    %1303 = vmatprep.mubr.bf16.mxu0 0
    %1304 = vmatmul.mubr.bf16.gmra.mrb[0].mxu0 %v1269
    %v1305 = vpop.f32.mrb[0].mxu0
    %v1306 = vadd.f32 0.0, %v1305
    %v1307 = vpop.f32.mrb[0].mxu0
    %v1308 = vpop.f32.mrb[0].mxu0
    %v1309 = vadd.f32 0.0, %v1308
    %v1310 = vpop.f32.mrb[0].mxu0
    %1311 = vdwg.mxu0
    %v1312 = vadd.f32 %v1244, %v1306
    %v1313 = vadd.f32 %v1247, %v1309
    %s1314 = scalar_lea.vmem %s3, 4
    %v1315 = vld [vmem:[%s1314] sm:$0x1]
    %v1317 = vlaneseq
    %v1318 = vshrl.u32 %v1317, 7
    %v1319 = vsub.s32 0, %v1318
    %v1320 = vrot.slane %v1315, %v1319
    %v1322 = vadd.f32 %v1312, %v1320
    %v1323 = vadd.f32 %v1313, %v1320
    %v1324 = vxor.u32 %v1322, 2147483648
    %v1325 = vxor.u32 %v1323, 2147483648
    %v1326 = vmul.f32 %v1324, 1.442695
    %v1327 = vpow.pop %v1326
    %v1328 = vmul.f32 %v1325, 1.442695
    %v1329 = vpow.pop %v1328
    %v1330 = vadd.f32 %v1327, 1.0
    %v1331 = vadd.f32 %v1329, 1.0
    %v1332 = vrcp.pop %v1330
    %v1333 = vmul.f32 1.0, %v1332
    %v1334 = vrcp.pop %v1331
    %v1335 = vmul.f32 1.0, %v1334
    %1338 = vrot.lane.b32.xlu0 %v1333, 96
    %v1339 = vpop.permute.xlu0 %1338
    %1340 = vrot.lane.b32.xlu0 %v1335, 96
    %v1341 = vpop.permute.xlu0 %1340
    %v1344 = vmul.f32 %v1322, %v1339
    %v1345 = vmul.f32 %v1323, %v1341
    %v1346 = vrot.slane %v1344, 7
    %v1347 = vrot.slane %v1345, 7
    %v1348 = vsel %vm187, %v1346, %v1347
    %v1349 = vsel %vm187, %v1347, %v1346
    %v1350 = vsel %vm181, %v1349, 0.0
    %v1351 = vsel %vm182, %v1348, 0.0
    %v1352 = vrot.slane %v1344, 6
    %v1353 = vrot.slane %v1345, 6
    %v1354 = vsel %vm194, %v1352, %v1353
    %v1355 = vsel %vm194, %v1353, %v1352
    %v1356 = vsel %vm183, %v1355, 0.0
    %v1357 = vsel %vm184, %v1354, 0.0
    %v1358 = vpack.c.bf16 %v1357, %v1356
    %s1359 = scalar_lea.vmem [#allocation2], 240
    %v1360 = vld [vmem:[%s1359] sm:$0xf]
    %v1361 = vld [vmem:[%s1359 + $0x4] sm:$0xf]
    %v1362 = vld [vmem:[%s1359 + $0x8] sm:$0xf]
    %v1363 = vld [vmem:[%s1359 + $0xc] sm:$0xf]
    %v1364 = vpack.c.bf16 %v1351, %v1350
    %s1365 = scalar_lea.vmem [#allocation2], 256
    %v1366 = vld [vmem:[%s1365] sm:$0xf]
    %v1367 = vld [vmem:[%s1365 + $0x4] sm:$0xf]
    %v1368 = vld [vmem:[%s1365 + $0x8] sm:$0xf]
    %v1369 = vld [vmem:[%s1365 + $0xc] sm:$0xf]
    %v1374 = vunpack.c.l.b16 %v1366
    %v1375 = vunpack.c.l.b16 %v1367
    %v1376 = vunpack.c.l.b16 %v1368
    %v1377 = vunpack.c.l.b16 %v1369
    %v1378 = vpack.c.b16 %v1375, %v1374
    %v1379 = vpack.c.b16 %v1377, %v1376
    %v1383 = vsel %vm222, %v1364, 0
    %1385 = vmatprep.subr.bf16.mxu0 0
    %1386 = vmatpush1.bf16.msra.mxu0 %v1378
    %1387 = vmatprep.subr.bf16.mxu0 0
    %1388 = vmatpush1.bf16.msra.mxu0 %v1379
    %1389 = vmatprep.subr.bf16.mxu0 0
    %1390 = vmatpush1.bf16.msra.mxu0 0
    %1391 = vmatprep.subr.bf16.mxu0 0
    %1392 = vmatpush1.bf16.msra.mxu0 0
    %1393 = vmatprep.subr.bf16.mxu0 0
    %1394 = vmatpush1.bf16.msra.mxu0 0
    %1395 = vmatprep.subr.bf16.mxu0 0
    %1396 = vmatpush1.bf16.msra.mxu0 0
    %1397 = vmatprep.subr.bf16.mxu0 0
    %1398 = vmatpush1.bf16.msra.mxu0 0
    %1399 = vmatprep.subr.bf16.mxu0 0
    %1400 = vmatpush1.bf16.msra.mxu0 0
    %1401 = vmatprep.subr.bf16.mxu0 0
    %1402 = vmatpush1.bf16.msra.mxu0 0
    %1403 = vmatprep.subr.bf16.mxu0 0
    %1404 = vmatpush1.bf16.msra.mxu0 0
    %1405 = vmatprep.subr.bf16.mxu0 0
    %1406 = vmatpush1.bf16.msra.mxu0 0
    %1407 = vmatprep.subr.bf16.mxu0 0
    %1408 = vmatpush1.bf16.msra.mxu0 0
    %1409 = vmatprep.subr.bf16.mxu0 0
    %1410 = vmatpush1.bf16.msra.mxu0 0
    %1411 = vmatprep.subr.bf16.mxu0 0
    %1412 = vmatpush1.bf16.msra.mxu0 0
    %1413 = vmatprep.subr.bf16.mxu0 0
    %1414 = vmatpush1.bf16.msra.mxu0 0
    %1415 = vmatprep.subr.bf16.mxu0 0
    %1416 = vmatpush1.bf16.msra.mxu0 0
    %1417 = vmatprep.mubr.bf16.mxu0 0
    %1418 = vmatmul.mubr.bf16.gmra.mrb[0].mxu0 %v1383
    %v1419 = vpop.f32.mrb[0].mxu0
    %v1420 = vadd.f32 0.0, %v1419
    %v1421 = vpop.f32.mrb[0].mxu0
    %v1422 = vpop.f32.mrb[0].mxu0
    %v1423 = vadd.f32 0.0, %v1422
    %v1424 = vpop.f32.mrb[0].mxu0
    %1425 = vdwg.mxu0
    %v1430 = vunpack.c.l.b16 %v1360
    %v1431 = vunpack.c.l.b16 %v1361
    %v1432 = vunpack.c.l.b16 %v1362
    %v1433 = vunpack.c.l.b16 %v1363
    %v1434 = vpack.c.b16 %v1431, %v1430
    %v1435 = vpack.c.b16 %v1433, %v1432
    %v1439 = vsel %vm222, %v1358, 0
    %1441 = vmatprep.subr.bf16.mxu0 0
    %1442 = vmatpush1.bf16.msra.mxu0 %v1434
    %1443 = vmatprep.subr.bf16.mxu0 0
    %1444 = vmatpush1.bf16.msra.mxu0 %v1435
    %1445 = vmatprep.subr.bf16.mxu0 0
    %1446 = vmatpush1.bf16.msra.mxu0 0
    %1447 = vmatprep.subr.bf16.mxu0 0
    %1448 = vmatpush1.bf16.msra.mxu0 0
    %1449 = vmatprep.subr.bf16.mxu0 0
    %1450 = vmatpush1.bf16.msra.mxu0 0
    %1451 = vmatprep.subr.bf16.mxu0 0
    %1452 = vmatpush1.bf16.msra.mxu0 0
    %1453 = vmatprep.subr.bf16.mxu0 0
    %1454 = vmatpush1.bf16.msra.mxu0 0
    %1455 = vmatprep.subr.bf16.mxu0 0
    %1456 = vmatpush1.bf16.msra.mxu0 0
    %1457 = vmatprep.subr.bf16.mxu0 0
    %1458 = vmatpush1.bf16.msra.mxu0 0
    %1459 = vmatprep.subr.bf16.mxu0 0
    %1460 = vmatpush1.bf16.msra.mxu0 0
    %1461 = vmatprep.subr.bf16.mxu0 0
    %1462 = vmatpush1.bf16.msra.mxu0 0
    %1463 = vmatprep.subr.bf16.mxu0 0
    %1464 = vmatpush1.bf16.msra.mxu0 0
    %1465 = vmatprep.subr.bf16.mxu0 0
    %1466 = vmatpush1.bf16.msra.mxu0 0
    %1467 = vmatprep.subr.bf16.mxu0 0
    %1468 = vmatpush1.bf16.msra.mxu0 0
    %1469 = vmatprep.subr.bf16.mxu0 0
    %1470 = vmatpush1.bf16.msra.mxu0 0
    %1471 = vmatprep.subr.bf16.mxu0 0
    %1472 = vmatpush1.bf16.msra.mxu0 0
    %1473 = vmatprep.mubr.bf16.mxu0 0
    %1474 = vmatmul.mubr.bf16.gmra.mrb[0].mxu0 %v1439
    %v1475 = vpop.f32.mrb[0].mxu0
    %v1476 = vadd.f32 %v1420, %v1475
    %v1477 = vpop.f32.mrb[0].mxu0
    %v1478 = vpop.f32.mrb[0].mxu0
    %v1479 = vadd.f32 %v1423, %v1478
    %v1480 = vpop.f32.mrb[0].mxu0
    %1481 = vdwg.mxu0
    %v1482 = vpack.c.bf16 %v1345, %v1344
    %s1483 = scalar_lea.vmem [#allocation2], 272
    %v1484 = vld [vmem:[%s1483] sm:$0xf]
    %v1485 = vld [vmem:[%s1483 + $0x4] sm:$0xf]
    %v1486 = vld [vmem:[%s1483 + $0x8] sm:$0xf]
    %v1487 = vld [vmem:[%s1483 + $0xc] sm:$0xf]
    %v1492 = vunpack.c.l.b16 %v1484
    %v1493 = vunpack.c.l.b16 %v1485
    %v1494 = vunpack.c.l.b16 %v1486
    %v1495 = vunpack.c.l.b16 %v1487
    %v1496 = vpack.c.b16 %v1493, %v1492
    %v1497 = vpack.c.b16 %v1495, %v1494
    %v1501 = vsel %vm222, %v1482, 0
    %1503 = vmatprep.subr.bf16.mxu0 0
    %1504 = vmatpush1.bf16.msra.mxu0 %v1496
    %1505 = vmatprep.subr.bf16.mxu0 0
    %1506 = vmatpush1.bf16.msra.mxu0 %v1497
    %1507 = vmatprep.subr.bf16.mxu0 0
    %1508 = vmatpush1.bf16.msra.mxu0 0
    %1509 = vmatprep.subr.bf16.mxu0 0
    %1510 = vmatpush1.bf16.msra.mxu0 0
    %1511 = vmatprep.subr.bf16.mxu0 0
    %1512 = vmatpush1.bf16.msra.mxu0 0
    %1513 = vmatprep.subr.bf16.mxu0 0
    %1514 = vmatpush1.bf16.msra.mxu0 0
    %1515 = vmatprep.subr.bf16.mxu0 0
    %1516 = vmatpush1.bf16.msra.mxu0 0
    %1517 = vmatprep.subr.bf16.mxu0 0
    %1518 = vmatpush1.bf16.msra.mxu0 0
    %1519 = vmatprep.subr.bf16.mxu0 0
    %1520 = vmatpush1.bf16.msra.mxu0 0
    %1521 = vmatprep.subr.bf16.mxu0 0
    %1522 = vmatpush1.bf16.msra.mxu0 0
    %1523 = vmatprep.subr.bf16.mxu0 0
    %1524 = vmatpush1.bf16.msra.mxu0 0
    %1525 = vmatprep.subr.bf16.mxu0 0
    %1526 = vmatpush1.bf16.msra.mxu0 0
    %1527 = vmatprep.subr.bf16.mxu0 0
    %1528 = vmatpush1.bf16.msra.mxu0 0
    %1529 = vmatprep.subr.bf16.mxu0 0
    %1530 = vmatpush1.bf16.msra.mxu0 0
    %1531 = vmatprep.subr.bf16.mxu0 0
    %1532 = vmatpush1.bf16.msra.mxu0 0
    %1533 = vmatprep.subr.bf16.mxu0 0
    %1534 = vmatpush1.bf16.msra.mxu0 0
    %1535 = vmatprep.mubr.bf16.mxu0 0
    %1536 = vmatmul.mubr.bf16.gmra.mrb[0].mxu0 %v1501
    %v1537 = vpop.f32.mrb[0].mxu0
    %v1538 = vadd.f32 0.0, %v1537
    %v1539 = vpop.f32.mrb[0].mxu0
    %v1540 = vpop.f32.mrb[0].mxu0
    %v1541 = vadd.f32 0.0, %v1540
    %v1542 = vpop.f32.mrb[0].mxu0
    %1543 = vdwg.mxu0
    %v1544 = vadd.f32 %v1476, %v1538
    %v1545 = vadd.f32 %v1479, %v1541
    %s1546 = scalar_lea.vmem %s3, 5
    %v1547 = vld [vmem:[%s1546] sm:$0x1]
    %v1549 = vlaneseq
    %v1550 = vshrl.u32 %v1549, 7
    %v1551 = vsub.s32 0, %v1550
    %v1552 = vrot.slane %v1547, %v1551
    %v1554 = vadd.f32 %v1544, %v1552
    %v1555 = vadd.f32 %v1545, %v1552
    %v1556 = vxor.u32 %v1554, 2147483648
    %v1557 = vxor.u32 %v1555, 2147483648
    %v1558 = vmul.f32 %v1556, 1.442695
    %v1559 = vpow.pop %v1558
    %v1560 = vmul.f32 %v1557, 1.442695
    %v1561 = vpow.pop %v1560
    %v1562 = vadd.f32 %v1559, 1.0
    %v1563 = vadd.f32 %v1561, 1.0
    %v1564 = vrcp.pop %v1562
    %v1565 = vmul.f32 1.0, %v1564
    %v1566 = vrcp.pop %v1563
    %v1567 = vmul.f32 1.0, %v1566
    %1570 = vrot.lane.b32.xlu0 %v1565, 96
    %v1571 = vpop.permute.xlu0 %1570
    %1572 = vrot.lane.b32.xlu0 %v1567, 96
    %v1573 = vpop.permute.xlu0 %1572
    %v1576 = vmul.f32 %v1554, %v1571
    %v1577 = vmul.f32 %v1555, %v1573
    %v1578 = vpack.c.bf16 %v1577, %v1576
    %v1579 = vld [vmem:[%s4] sm:$0xf]
    %v1580 = vld [vmem:[%s4 + $0x4] sm:$0xf]
    %v1581 = vld [vmem:[%s4 + $0x8] sm:$0xf]
    %v1582 = vld [vmem:[%s4 + $0xc] sm:$0xf]
    %v1587 = vunpack.c.l.b16 %v1579
    %v1588 = vunpack.c.l.b16 %v1580
    %v1589 = vunpack.c.l.b16 %v1581
    %v1590 = vunpack.c.l.b16 %v1582
    %v1591 = vpack.c.b16 %v1588, %v1587
    %v1592 = vpack.c.b16 %v1590, %v1589
    %v1596 = vsel %vm222, %v1578, 0
    %1598 = vmatprep.subr.bf16.mxu0 0
    %1599 = vmatpush1.bf16.msra.mxu0 %v1591
    %1600 = vmatprep.subr.bf16.mxu0 0
    %1601 = vmatpush1.bf16.msra.mxu0 %v1592
    %1602 = vmatprep.subr.bf16.mxu0 0
    %1603 = vmatpush1.bf16.msra.mxu0 0
    %1604 = vmatprep.subr.bf16.mxu0 0
    %1605 = vmatpush1.bf16.msra.mxu0 0
    %1606 = vmatprep.subr.bf16.mxu0 0
    %1607 = vmatpush1.bf16.msra.mxu0 0
    %1608 = vmatprep.subr.bf16.mxu0 0
    %1609 = vmatpush1.bf16.msra.mxu0 0
    %1610 = vmatprep.subr.bf16.mxu0 0
    %1611 = vmatpush1.bf16.msra.mxu0 0
    %1612 = vmatprep.subr.bf16.mxu0 0
    %1613 = vmatpush1.bf16.msra.mxu0 0
    %1614 = vmatprep.subr.bf16.mxu0 0
    %1615 = vmatpush1.bf16.msra.mxu0 0
    %1616 = vmatprep.subr.bf16.mxu0 0
    %1617 = vmatpush1.bf16.msra.mxu0 0
    %1618 = vmatprep.subr.bf16.mxu0 0
    %1619 = vmatpush1.bf16.msra.mxu0 0
    %1620 = vmatprep.subr.bf16.mxu0 0
    %1621 = vmatpush1.bf16.msra.mxu0 0
    %1622 = vmatprep.subr.bf16.mxu0 0
    %1623 = vmatpush1.bf16.msra.mxu0 0
    %1624 = vmatprep.subr.bf16.mxu0 0
    %1625 = vmatpush1.bf16.msra.mxu0 0
    %1626 = vmatprep.subr.bf16.mxu0 0
    %1627 = vmatpush1.bf16.msra.mxu0 0
    %1628 = vmatprep.subr.bf16.mxu0 0
    %1629 = vmatpush1.bf16.msra.mxu0 0
    %1630 = vmatprep.mubr.bf16.mxu0 0
    %1631 = vmatmul.mubr.bf16.gmra.mrb[0].mxu0 %v1596
    %v1632 = vpop.f32.mrb[0].mxu0
    %v1633 = vadd.f32 0.0, %v1632
    %v1634 = vpop.f32.mrb[0].mxu0
    %v1635 = vpop.f32.mrb[0].mxu0
    %v1636 = vadd.f32 0.0, %v1635
    %v1637 = vpop.f32.mrb[0].mxu0
    %1638 = vdwg.mxu0
    %v1639 = vshra.s32 %v177, 3
    %v1640 = vshra.s32 %v178, 3
    %v1641 = vshra.s32 %v57, 4
    %vm1642 = vcmp.eq.s32.totalorder %v1639, %v1641
    %vm1643 = vcmp.eq.s32.totalorder %v1640, %v1641
    %v1644 = vsel %vm1642, 0.0, -1e+09
    %v1645 = vsel %vm1643, 0.0, -1e+09
    %v1646 = vpack.c.bf16 %v1636, %v1633
    %v1647 = vld [vmem:[%s5] sm:$0xf]
    %v1648 = vld [vmem:[%s5 + $0x4] sm:$0xf]
    %v1649 = vld [vmem:[%s5 + $0x8] sm:$0xf]
    %v1650 = vld [vmem:[%s5 + $0xc] sm:$0xf]
    %v1651 = vld [vmem:[%s5 + $0x10] sm:$0xf]
    %v1652 = vld [vmem:[%s5 + $0x14] sm:$0xf]
    %v1653 = vld [vmem:[%s5 + $0x18] sm:$0xf]
    %v1654 = vld [vmem:[%s5 + $0x1c] sm:$0xf]
    %v1663 = vunpack.c.l.b16 %v1647
    %v1664 = vunpack.c.l.b16 %v1648
    %v1665 = vunpack.c.l.b16 %v1649
    %v1666 = vunpack.c.l.b16 %v1650
    %v1667 = vunpack.c.l.b16 %v1651
    %v1668 = vunpack.c.l.b16 %v1652
    %v1669 = vunpack.c.l.b16 %v1653
    %v1670 = vunpack.c.l.b16 %v1654
    %v1671 = vpack.c.b16 %v1664, %v1663
    %v1672 = vpack.c.b16 %v1666, %v1665
    %v1673 = vpack.c.b16 %v1668, %v1667
    %v1674 = vpack.c.b16 %v1670, %v1669
    %vm1679 = vcmask 523264
    %v1681 = vsel %vm1679, %v1646, 0
    %1683 = vmatprep.subr.bf16.mxu0 0
    %1684 = vmatpush1.bf16.msra.mxu0 %v1671
    %1685 = vmatprep.subr.bf16.mxu0 0
    %1686 = vmatpush1.bf16.msra.mxu0 %v1672
    %1687 = vmatprep.subr.bf16.mxu0 0
    %1688 = vmatpush1.bf16.msra.mxu0 %v1673
    %1689 = vmatprep.subr.bf16.mxu0 0
    %1690 = vmatpush1.bf16.msra.mxu0 %v1674
    %1691 = vmatprep.subr.bf16.mxu0 0
    %1692 = vmatpush1.bf16.msra.mxu0 0
    %1693 = vmatprep.subr.bf16.mxu0 0
    %1694 = vmatpush1.bf16.msra.mxu0 0
    %1695 = vmatprep.subr.bf16.mxu0 0
    %1696 = vmatpush1.bf16.msra.mxu0 0
    %1697 = vmatprep.subr.bf16.mxu0 0
    %1698 = vmatpush1.bf16.msra.mxu0 0
    %1699 = vmatprep.subr.bf16.mxu0 0
    %1700 = vmatpush1.bf16.msra.mxu0 0
    %1701 = vmatprep.subr.bf16.mxu0 0
    %1702 = vmatpush1.bf16.msra.mxu0 0
    %1703 = vmatprep.subr.bf16.mxu0 0
    %1704 = vmatpush1.bf16.msra.mxu0 0
    %1705 = vmatprep.subr.bf16.mxu0 0
    %1706 = vmatpush1.bf16.msra.mxu0 0
    %1707 = vmatprep.subr.bf16.mxu0 0
    %1708 = vmatpush1.bf16.msra.mxu0 0
    %1709 = vmatprep.subr.bf16.mxu0 0
    %1710 = vmatpush1.bf16.msra.mxu0 0
    %1711 = vmatprep.subr.bf16.mxu0 0
    %1712 = vmatpush1.bf16.msra.mxu0 0
    %1713 = vmatprep.subr.bf16.mxu0 0
    %1714 = vmatpush1.bf16.msra.mxu0 0
    %1715 = vmatprep.mubr.bf16.mxu0 0
    %1716 = vmatmul.mubr.bf16.gmra.mrb[0].mxu0 %v1681
    %v1717 = vpop.f32.mrb[0].mxu0
    %v1718 = vadd.f32 %v1644, %v1717
    %v1719 = vpop.f32.mrb[0].mxu0
    %v1720 = vpop.f32.mrb[0].mxu0
    %v1721 = vadd.f32 %v1645, %v1720
    %v1722 = vpop.f32.mrb[0].mxu0
    %1723 = vdwg.mxu0
    %v1724 = vsel %vm222, %v1718, -inf
    %1725 = vmax.xlane.f32.xlu0 %v1724
    %v1726 = vpop.xlane.xlu0 %1725
    %v1727 = vsel %vm222, %v1721, -inf
    %1728 = vmax.xlane.f32.xlu0 %v1727
    %v1729 = vpop.xlane.xlu0 %1728
    %v1730 = vsub.f32 %v1718, %v1726
    %v1731 = vsub.f32 %v1721, %v1729
    %v1732 = vmul.f32 %v1730, 1.442695
    %v1733 = vpow.pop %v1732
    %v1734 = vmul.f32 %v1731, 1.442695
    %v1735 = vpow.pop %v1734
    %v1736 = vsel %vm222, %v1733, 0.0
    %1737 = vadd.xlane.f32.xlu0 %v1736
    %v1738 = vpop.xlane.xlu0 %1737
    %v1739 = vsel %vm222, %v1735, 0.0
    %1740 = vadd.xlane.f32.xlu0 %v1739
    %v1741 = vpop.xlane.xlu0 %1740
    %v1742 = vrcp.pop %v1738
    %v1743 = vrcp.pop %v1741
    %v1744 = vmul.f32 %v1733, %v1742
    %v1745 = vmul.f32 %v1735, %v1743
    %v1746 = vpack.c.bf16 %v1745, %v1744
    %v1747 = vld [vmem:[%s6] sm:$0xf]
    %v1748 = vld [vmem:[%s6 + $0x4] sm:$0xf]
    %v1749 = vld [vmem:[%s6 + $0x8] sm:$0xf]
    %v1750 = vld [vmem:[%s6 + $0xc] sm:$0xf]
    %v1755 = vunpack.c.l.b16 %v1747
    %v1756 = vunpack.c.l.b16 %v1748
    %v1757 = vunpack.c.l.b16 %v1749
    %v1758 = vunpack.c.l.b16 %v1750
    %v1759 = vpack.c.b16 %v1756, %v1755
    %v1760 = vpack.c.b16 %v1758, %v1757
    %v1764 = vsel %vm222, %v1746, 0
    %1766 = vmatprep.subr.bf16.mxu0 0
    %1767 = vmatpush1.bf16.msra.mxu0 %v1759
    %1768 = vmatprep.subr.bf16.mxu0 0
    %1769 = vmatpush1.bf16.msra.mxu0 %v1760
    %1770 = vmatprep.subr.bf16.mxu0 0
    %1771 = vmatpush1.bf16.msra.mxu0 0
    %1772 = vmatprep.subr.bf16.mxu0 0
    %1773 = vmatpush1.bf16.msra.mxu0 0
    %1774 = vmatprep.subr.bf16.mxu0 0
    %1775 = vmatpush1.bf16.msra.mxu0 0
    %1776 = vmatprep.subr.bf16.mxu0 0
    %1777 = vmatpush1.bf16.msra.mxu0 0
    %1778 = vmatprep.subr.bf16.mxu0 0
    %1779 = vmatpush1.bf16.msra.mxu0 0
    %1780 = vmatprep.subr.bf16.mxu0 0
    %1781 = vmatpush1.bf16.msra.mxu0 0
    %1782 = vmatprep.subr.bf16.mxu0 0
    %1783 = vmatpush1.bf16.msra.mxu0 0
    %1784 = vmatprep.subr.bf16.mxu0 0
    %1785 = vmatpush1.bf16.msra.mxu0 0
    %1786 = vmatprep.subr.bf16.mxu0 0
    %1787 = vmatpush1.bf16.msra.mxu0 0
    %1788 = vmatprep.subr.bf16.mxu0 0
    %1789 = vmatpush1.bf16.msra.mxu0 0
    %1790 = vmatprep.subr.bf16.mxu0 0
    %1791 = vmatpush1.bf16.msra.mxu0 0
    %1792 = vmatprep.subr.bf16.mxu0 0
    %1793 = vmatpush1.bf16.msra.mxu0 0
    %1794 = vmatprep.subr.bf16.mxu0 0
    %1795 = vmatpush1.bf16.msra.mxu0 0
    %1796 = vmatprep.subr.bf16.mxu0 0
    %1797 = vmatpush1.bf16.msra.mxu0 0
    %1798 = vmatprep.mubr.bf16.mxu0 0
    %1799 = vmatmul.mubr.bf16.gmra.mrb[0].mxu0 %v1764
    %v1800 = vpop.f32.mrb[0].mxu0
    %v1801 = vadd.f32 0.0, %v1800
    %v1802 = vpop.f32.mrb[0].mxu0
    %v1803 = vpop.f32.mrb[0].mxu0
    %v1804 = vadd.f32 0.0, %v1803
    %v1805 = vpop.f32.mrb[0].mxu0
    %1806 = vdwg.mxu0
    %v1807 = vpack.c.bf16 %v1804, %v1801
    %v1808 = vld [vmem:[%s7] sm:$0xf]
    %v1809 = vld [vmem:[%s7 + $0x4] sm:$0xf]
    %v1810 = vld [vmem:[%s7 + $0x8] sm:$0xf]
    %v1811 = vld [vmem:[%s7 + $0xc] sm:$0xf]
    %v1812 = vld [vmem:[%s7 + $0x10] sm:$0xf]
    %v1813 = vld [vmem:[%s7 + $0x14] sm:$0xf]
    %v1814 = vld [vmem:[%s7 + $0x18] sm:$0xf]
    %v1815 = vld [vmem:[%s7 + $0x1c] sm:$0xf]
    %v1816 = vld [vmem:[%s8] sm:$0xf]
    %v1817 = vld [vmem:[%s8 + $0x4] sm:$0xf]
    %v1818 = vld [vmem:[%s8 + $0x8] sm:$0xf]
    %v1819 = vld [vmem:[%s8 + $0xc] sm:$0xf]
    %v1824 = vunpack.c.l.b16 %v1816
    %v1825 = vunpack.c.l.b16 %v1817
    %v1826 = vunpack.c.l.b16 %v1818
    %v1827 = vunpack.c.l.b16 %v1819
    %v1828 = vpack.c.b16 %v1825, %v1824
    %v1829 = vpack.c.b16 %v1827, %v1826
    %1832 = vmatprep.subr.bf16.mxu0 0
    %1833 = vmatpush1.bf16.msra.mxu0 %v1828
    %1834 = vmatprep.subr.bf16.mxu0 0
    %1835 = vmatpush1.bf16.msra.mxu0 %v1829
    %1836 = vmatprep.subr.bf16.mxu0 0
    %1837 = vmatpush1.bf16.msra.mxu0 0
    %1838 = vmatprep.subr.bf16.mxu0 0
    %1839 = vmatpush1.bf16.msra.mxu0 0
    %1840 = vmatprep.subr.bf16.mxu0 0
    %1841 = vmatpush1.bf16.msra.mxu0 0
    %1842 = vmatprep.subr.bf16.mxu0 0
    %1843 = vmatpush1.bf16.msra.mxu0 0
    %1844 = vmatprep.subr.bf16.mxu0 0
    %1845 = vmatpush1.bf16.msra.mxu0 0
    %1846 = vmatprep.subr.bf16.mxu0 0
    %1847 = vmatpush1.bf16.msra.mxu0 0
    %1848 = vmatprep.subr.bf16.mxu0 0
    %1849 = vmatpush1.bf16.msra.mxu0 0
    %1850 = vmatprep.subr.bf16.mxu0 0
    %1851 = vmatpush1.bf16.msra.mxu0 0
    %1852 = vmatprep.subr.bf16.mxu0 0
    %1853 = vmatpush1.bf16.msra.mxu0 0
    %1854 = vmatprep.subr.bf16.mxu0 0
    %1855 = vmatpush1.bf16.msra.mxu0 0
    %1856 = vmatprep.subr.bf16.mxu0 0
    %1857 = vmatpush1.bf16.msra.mxu0 0
    %1858 = vmatprep.subr.bf16.mxu0 0
    %1859 = vmatpush1.bf16.msra.mxu0 0
    %1860 = vmatprep.subr.bf16.mxu0 0
    %1861 = vmatpush1.bf16.msra.mxu0 0
    %1862 = vmatprep.subr.bf16.mxu0 0
    %1863 = vmatpush1.bf16.msra.mxu0 0
    %1864 = vmatprep.mubr.bf16.mxu0 0
    %1865 = vmatmul.mubr.bf16.gmra.mrb[0].mxu0 %v1596
    %v1866 = vpop.f32.mrb[0].mxu0
    %v1867 = vadd.f32 0.0, %v1866
    %v1868 = vpop.f32.mrb[0].mxu0
    %v1869 = vpop.f32.mrb[0].mxu0
    %v1870 = vadd.f32 0.0, %v1869
    %v1871 = vpop.f32.mrb[0].mxu0
    %1872 = vdwg.mxu0
    %v1881 = vunpack.c.l.b16 %v1808
    %v1882 = vunpack.c.l.b16 %v1809
    %v1883 = vunpack.c.l.b16 %v1810
    %v1884 = vunpack.c.l.b16 %v1811
    %v1885 = vunpack.c.l.b16 %v1812
    %v1886 = vunpack.c.l.b16 %v1813
    %v1887 = vunpack.c.l.b16 %v1814
    %v1888 = vunpack.c.l.b16 %v1815
    %v1889 = vpack.c.b16 %v1882, %v1881
    %v1890 = vpack.c.b16 %v1884, %v1883
    %v1891 = vpack.c.b16 %v1886, %v1885
    %v1892 = vpack.c.b16 %v1888, %v1887
    %v1898 = vsel %vm1679, %v1807, 0
    %1900 = vmatprep.subr.bf16.mxu0 0
    %1901 = vmatpush1.bf16.msra.mxu0 %v1889
    %1902 = vmatprep.subr.bf16.mxu0 0
    %1903 = vmatpush1.bf16.msra.mxu0 %v1890
    %1904 = vmatprep.subr.bf16.mxu0 0
    %1905 = vmatpush1.bf16.msra.mxu0 %v1891
    %1906 = vmatprep.subr.bf16.mxu0 0
    %1907 = vmatpush1.bf16.msra.mxu0 %v1892
    %1908 = vmatprep.subr.bf16.mxu0 0
    %1909 = vmatpush1.bf16.msra.mxu0 0
    %1910 = vmatprep.subr.bf16.mxu0 0
    %1911 = vmatpush1.bf16.msra.mxu0 0
    %1912 = vmatprep.subr.bf16.mxu0 0
    %1913 = vmatpush1.bf16.msra.mxu0 0
    %1914 = vmatprep.subr.bf16.mxu0 0
    %1915 = vmatpush1.bf16.msra.mxu0 0
    %1916 = vmatprep.subr.bf16.mxu0 0
    %1917 = vmatpush1.bf16.msra.mxu0 0
    %1918 = vmatprep.subr.bf16.mxu0 0
    %1919 = vmatpush1.bf16.msra.mxu0 0
    %1920 = vmatprep.subr.bf16.mxu0 0
    %1921 = vmatpush1.bf16.msra.mxu0 0
    %1922 = vmatprep.subr.bf16.mxu0 0
    %1923 = vmatpush1.bf16.msra.mxu0 0
    %1924 = vmatprep.subr.bf16.mxu0 0
    %1925 = vmatpush1.bf16.msra.mxu0 0
    %1926 = vmatprep.subr.bf16.mxu0 0
    %1927 = vmatpush1.bf16.msra.mxu0 0
    %1928 = vmatprep.subr.bf16.mxu0 0
    %1929 = vmatpush1.bf16.msra.mxu0 0
    %1930 = vmatprep.subr.bf16.mxu0 0
    %1931 = vmatpush1.bf16.msra.mxu0 0
    %1932 = vmatprep.mubr.bf16.mxu0 0
    %1933 = vmatmul.mubr.bf16.gmra.mrb[0].mxu0 %v1898
    %v1934 = vpop.f32.mrb[0].mxu0
    %v1935 = vadd.f32 %v1867, %v1934
    %v1936 = vpop.f32.mrb[0].mxu0
    %v1937 = vpop.f32.mrb[0].mxu0
    %v1938 = vadd.f32 %v1870, %v1937
    %v1939 = vpop.f32.mrb[0].mxu0
    %1940 = vdwg.mxu0
    %v1941 = vld [vmem:[%s9] sm:$0x1]
    %v1943 = vlaneseq
    %v1944 = vshrl.u32 %v1943, 7
    %v1945 = vsub.s32 0, %v1944
    %v1946 = vrot.slane %v1941, %v1945
    %v1948 = vadd.f32 %v1935, %v1946
    %v1949 = vadd.f32 %v1938, %v1946
    %v1950 = vmul.f32 %v1948, 0.1
    %v1951 = vmul.f32 %v1949, 0.1
    %v1952 = vmax.f32 %v1948, %v1950
    %v1953 = vmax.f32 %v1949, %v1951
    %v1954 = vpack.c.bf16 %v1953, %v1952
    %v1955 = vld [vmem:[%s10] sm:$0xf]
    %v1956 = vld [vmem:[%s10 + $0x4] sm:$0xf]
    %v1957 = vld [vmem:[%s10 + $0x8] sm:$0xf]
    %v1958 = vld [vmem:[%s10 + $0xc] sm:$0xf]
    %v1959 = vld [vmem:[%s10 + $0x10] sm:$0xf]
    %v1960 = vld [vmem:[%s10 + $0x14] sm:$0xf]
    %v1961 = vld [vmem:[%s10 + $0x18] sm:$0xf]
    %v1962 = vld [vmem:[%s10 + $0x1c] sm:$0xf]
    %v1963 = vld [vmem:[%s10 + $0x20] sm:$0xf]
    %v1964 = vld [vmem:[%s10 + $0x24] sm:$0xf]
    %v1965 = vld [vmem:[%s10 + $0x28] sm:$0xf]
    %v1966 = vld [vmem:[%s10 + $0x2c] sm:$0xf]
    %v1967 = vld [vmem:[%s10 + $0x30] sm:$0xf]
    %v1968 = vld [vmem:[%s10 + $0x34] sm:$0xf]
    %v1969 = vld [vmem:[%s10 + $0x38] sm:$0xf]
    %v1970 = vld [vmem:[%s10 + $0x3c] sm:$0xf]
    %v1987 = vunpack.c.l.b16 %v1955
    %v1988 = vunpack.c.l.b16 %v1956
    %v1989 = vunpack.c.l.b16 %v1957
    %v1990 = vunpack.c.l.b16 %v1958
    %v1991 = vunpack.c.l.b16 %v1959
    %v1992 = vunpack.c.l.b16 %v1960
    %v1993 = vunpack.c.l.b16 %v1961
    %v1994 = vunpack.c.l.b16 %v1962
    %v1995 = vunpack.c.l.b16 %v1963
    %v1996 = vunpack.c.l.b16 %v1964
    %v1997 = vunpack.c.l.b16 %v1965
    %v1998 = vunpack.c.l.b16 %v1966
    %v1999 = vunpack.c.l.b16 %v1967
    %v2000 = vunpack.c.l.b16 %v1968
    %v2001 = vunpack.c.l.b16 %v1969
    %v2002 = vunpack.c.l.b16 %v1970
    %v2003 = vpack.c.b16 %v1988, %v1987
    %v2004 = vpack.c.b16 %v1990, %v1989
    %v2005 = vpack.c.b16 %v1992, %v1991
    %v2006 = vpack.c.b16 %v1994, %v1993
    %v2007 = vpack.c.b16 %v1996, %v1995
    %v2008 = vpack.c.b16 %v1998, %v1997
    %v2009 = vpack.c.b16 %v2000, %v1999
    %v2010 = vpack.c.b16 %v2002, %v2001
    %2019 = vmatprep.subr.bf16.mxu0 0
    %2020 = vmatpush1.bf16.msra.mxu0 %v2003
    %2021 = vmatprep.subr.bf16.mxu0 0
    %2022 = vmatpush1.bf16.msra.mxu0 %v2004
    %2023 = vmatprep.subr.bf16.mxu0 0
    %2024 = vmatpush1.bf16.msra.mxu0 %v2005
    %2025 = vmatprep.subr.bf16.mxu0 0
    %2026 = vmatpush1.bf16.msra.mxu0 %v2006
    %2027 = vmatprep.subr.bf16.mxu0 0
    %2028 = vmatpush1.bf16.msra.mxu0 %v2007
    %2029 = vmatprep.subr.bf16.mxu0 0
    %2030 = vmatpush1.bf16.msra.mxu0 %v2008
    %2031 = vmatprep.subr.bf16.mxu0 0
    %2032 = vmatpush1.bf16.msra.mxu0 %v2009
    %2033 = vmatprep.subr.bf16.mxu0 0
    %2034 = vmatpush1.bf16.msra.mxu0 %v2010
    %2035 = vmatprep.subr.bf16.mxu0 0
    %2036 = vmatpush1.bf16.msra.mxu0 0
    %2037 = vmatprep.subr.bf16.mxu0 0
    %2038 = vmatpush1.bf16.msra.mxu0 0
    %2039 = vmatprep.subr.bf16.mxu0 0
    %2040 = vmatpush1.bf16.msra.mxu0 0
    %2041 = vmatprep.subr.bf16.mxu0 0
    %2042 = vmatpush1.bf16.msra.mxu0 0
    %2043 = vmatprep.subr.bf16.mxu0 0
    %2044 = vmatpush1.bf16.msra.mxu0 0
    %2045 = vmatprep.subr.bf16.mxu0 0
    %2046 = vmatpush1.bf16.msra.mxu0 0
    %2047 = vmatprep.subr.bf16.mxu0 0
    %2048 = vmatpush1.bf16.msra.mxu0 0
    %2049 = vmatprep.subr.bf16.mxu0 0
    %2050 = vmatpush1.bf16.msra.mxu0 0
    %2051 = vmatprep.mubr.bf16.mxu0 0
    %2052 = vmatmul.mubr.bf16.gmra.mrb[0].mxu0 %v1954
    %v2053 = vpop.f32.mrb[0].mxu0
    %v2054 = vadd.f32 0.0, %v2053
    %v2055 = vpop.f32.mrb[0].mxu0
    %v2056 = vpop.f32.mrb[0].mxu0
    %v2057 = vadd.f32 0.0, %v2056
    %v2058 = vpop.f32.mrb[0].mxu0
    %2059 = vdwg.mxu0
    %2060 = vmax.xlane.f32.xlu0 %v2054
    %v2061 = vpop.xlane.xlu0 %2060
    %2062 = vmax.xlane.f32.xlu0 %v2057
    %v2063 = vpop.xlane.xlu0 %2062
    %v2064 = vsub.f32 %v2054, %v2061
    %v2065 = vsub.f32 %v2057, %v2063
    %v2066 = vmul.f32 %v2064, 1.442695
    %v2067 = vpow.pop %v2066
    %v2068 = vmul.f32 %v2065, 1.442695
    %v2069 = vpow.pop %v2068
    %2070 = vadd.xlane.f32.xlu0 %v2067
    %v2071 = vpop.xlane.xlu0 %2070
    %2072 = vadd.xlane.f32.xlu0 %v2069
    %v2073 = vpop.xlane.xlu0 %2072
    %v2074 = vlog2.pop %v2071
    %v2075 = vmul.f32 %v2074, 0.6931472
    %v2076 = vlog2.pop %v2073
    %v2077 = vmul.f32 %v2076, 0.6931472
    %v2078 = vadd.f32 %v2061, %v2075
    %v2079 = vadd.f32 %v2063, %v2077
    %v2080 = vsub.f32 %v2054, %v2078
    %v2081 = vsub.f32 %v2057, %v2079
    %2082 = vst [vmem:[#allocation5] sm:$0xff] %v2080
    %2083 = vst [vmem:[#allocation5 + $0x8] sm:$0xff] %v2081
    // Predicated region
    $region50: #{cnn_cnn_ce_forward.1} parent=1 // pred_check
      _
    $region51: #{cnn_cnn_ce_forward.1} parent=1 // pred_check_branch
      %2085 = sbr.rel (0) target = $region53
    $region52: #{cnn_cnn_ce_forward.1} parent=1 // pred_region
      %s2087 = ssub.s32 256, 256
      %2088 = vsyncadd [#allocation4], %s2087
      %s2089 = sshll.u32 [#allocation5], 4
      %s2090 = int_to_ptr.vmem [resolvable:$true] %s2089
      %2095 = dma.vmem_to_hbm [thread:$0]  %s2090, 256, %s11, [#allocation4], 128, 128, 8
    $region53: #{cnn_cnn_ce_forward.1} parent=1 // pred_fallthru
      _
    // Predicated region
    $region54: #{cnn_cnn_ce_forward.1} parent=1 // pred_check
      _
    $region55: #{cnn_cnn_ce_forward.1} parent=1 // pred_check_branch
      %2097 = sbr.rel (0) target = $region57
    $region56: #{cnn_cnn_ce_forward.1} parent=1 // pred_region
      %2098 = dma.done [#allocation4], 256
    $region57: #{cnn_cnn_ce_forward.1} parent=1 // pred_fallthru
      _
    %2099 = vsyncpa [#allocation3], 1
    %2100 = vsyncpa [#allocation4], 1

</llo_original>
